<compile_context>
chip_gen: v5e
topology: v5e:2x2
jax: 0.10.0
libtpu: 0.0.40
codegen_flags: <defaults>
</compile_context>

<pallas_src>
import functools

import jax
import jax.numpy as jnp
import numpy as np
from jax.experimental import pallas as pl
from jax.experimental.pallas import tpu as pltpu

BN_EPS = 1e-5
AGG_EPS = 1e-6
_UNIT = 16          # sublane granularity safe for both f32 and bf16 tiles


def _round_up(x, m):
    return (x + m - 1) // m * m


def _largest_tile(total, target):
    """Largest divisor of `total` that is <= target and a multiple of 16 (else total)."""
    if total <= target:
        return total
    for t in range(min(target, total), _UNIT - 1, -1):
        if total % t == 0 and t % _UNIT == 0:
            return t
    return total


def _onehot(cond, dtype):
    # bool -> {0, 1} with a single select directly in the target dtype (no extra convert).
    return jnp.where(cond, jnp.asarray(1.0, dtype), jnp.asarray(0.0, dtype))


def _gatedgcn_aggregate_kernel(idx_ref, h_ref, e_ref,
                               w_node_ref, b_node_ref, wc_ref, bc_ref,
                               bn_h_ref, bn_e_ref,
                               h_out_ref, e_pre_ref, e_aff_ref,
                               node_proj_ref, acc_ref,
                               e_shift_ref, e_sum_ref, e_sq_ref,
                               *, n_nodes, n_edges, sub, mxu_dtype):
    g = pl.program_id(0)
    te, d = e_ref.shape
    npad = h_ref.shape[0]
    n_sub = te // sub
    f32 = jnp.float32
    approx_recip = jnp.dtype(mxu_dtype) != jnp.dtype(jnp.float32)

    # ---- init (first edge tile): zero accumulators, project all node features once.
    @pl.when(g == 0)
    def _init():
        acc_ref[...] = jnp.zeros_like(acc_ref)
        e_sum_ref[...] = jnp.zeros_like(e_sum_ref)
        e_sq_ref[...] = jnp.zeros_like(e_sq_ref)
        # fused node-side Linears: h @ [Wb | Wd | We | Wa] -> [Npad, 4D] (lane dense)
        proj0 = jnp.dot(h_ref[...].astype(mxu_dtype), w_node_ref[...],
                        preferred_element_type=f32) + b_node_ref[...]
        node_proj_ref[...] = proj0.astype(mxu_dtype)

    proj = node_proj_ref[...]                      # [Npad, 4D] = [Bh | Dh | Eh | Ah]

    # ---- two-level tiling: per pipelined edge tile, iterate SUB-row sub-chunks
    # (unrolled) so the live set (one-hots + matmul results) stays within vregs.
    def sub_body(c, carry):
        row0 = pl.multiple_of(c * sub, sub)
        idx = idx_ref[0, pl.ds(row0, sub), :]      # [SUB, 2] int32 (src, dst)
        src_col = idx[:, 0:1]
        dst_col = idx[:, 1:2]

        lane_iota = jax.lax.broadcasted_iota(jnp.int32, (sub, npad), 1)
        ssrc = _onehot(lane_iota == src_col, mxu_dtype)    # [SUB, Npad] gather @ src
        sdst = _onehot(lane_iota == dst_col, mxu_dtype)    # [SUB, Npad] gather @ dst

        # full-4D-wide gathers (128-lane-aligned MXU operands); slice results in-register
        g_src = jnp.dot(ssrc, proj, preferred_element_type=f32)   # [SUB, 4D]
        g_dst = jnp.dot(sdst, proj, preferred_element_type=f32)   # [SUB, 4D]
        bh_src = g_src[:, 0:d]
        dh_src = g_src[:, d:2 * d]
        eh_dst = g_dst[:, 2 * d:3 * d]

        # edge projection C e
        ce = jnp.dot(e_ref[pl.ds(row0, sub), :].astype(mxu_dtype), wc_ref[...],
                     preferred_element_type=f32) + bc_ref[...]

        # message: e_ij = C e + D h_src + E h_dst   (pre-BN; written out for pass 2)
        e_msg = ce + dh_src + eh_dst
        e_pre_ref[pl.ds(row0, sub), :] = e_msg.astype(e_pre_ref.dtype)

        sigma = jax.nn.sigmoid(e_msg)              # elementwise math stays f32 (v5e)

        # fused scatter-add: [num | den] += Sdst^T @ [sigma * Bh_src | sigma]
        # (contract the edge axis of sdst directly -- no transposed one-hot build)
        scat_in = jnp.concatenate([sigma * bh_src, sigma], axis=-1).astype(mxu_dtype)
        acc_ref[...] += jax.lax.dot_general(
            sdst, scat_in, dimension_numbers=(((0,), (0,)), ((), ())),
            preferred_element_type=f32)

        # streaming (shifted) BatchNorm statistics for e; mask padded edge rows out.
        base = g * te + row0
        evalid = _onehot(
            jax.lax.broadcasted_iota(jnp.int32, (sub, 1), 0) + base < n_edges, f32)

        @pl.when(jnp.logical_and(g == 0, c == 0))
        def _set_shift():
            # first-chunk per-feature mean as the shift -> numerically stable variance
            cnt0 = min(sub, n_edges)
            e_shift_ref[...] = (jnp.sum(e_msg * evalid, axis=0, keepdims=True)
                                * (1.0 / cnt0))

        e_cen = (e_msg - e_shift_ref[...]) * evalid
        e_sum_ref[...] += jnp.sum(e_cen, axis=0, keepdims=True)
        e_sq_ref[...] += jnp.sum(e_cen * e_cen, axis=0, keepdims=True)
        return carry

    jax.lax.fori_loop(0, n_sub, sub_body, 0, unroll=True)

    # ---- finalize (last edge tile): node update + BN/ReLU/residual, edge BN affine
    @pl.when(g == pl.num_programs(0) - 1)
    def _finalize():
        acc = acc_ref[...]
        num = acc[:, 0:d]
        den = acc[:, d:2 * d]
        ah = proj[:, 3 * d:4 * d].astype(f32)
        # approximate reciprocal -> EUP slot (idle next to MXU/VPU work here)
        h_agg = ah + num * pl.reciprocal(den + AGG_EPS, approx=approx_recip)

        # node BatchNorm over the n_nodes real rows only (training-mode batch stats)
        nmask = _onehot(
            jax.lax.broadcasted_iota(jnp.int32, (npad, 1), 0) < n_nodes, f32)
        mu_h = jnp.sum(h_agg * nmask, axis=0, keepdims=True) * (1.0 / n_nodes)
        cen = (h_agg - mu_h) * nmask
        var_h = jnp.sum(cen * cen, axis=0, keepdims=True) * (1.0 / n_nodes)
        gamma_h = bn_h_ref[0:1, :]
        beta_h = bn_h_ref[1:2, :]
        h_bn = gamma_h * (h_agg - mu_h) * jax.lax.rsqrt(var_h + BN_EPS) + beta_h
        # ReLU + residual (dropout p = 0.0 -> identity)
        # TODO(synk): stochastic dropout (p > 0, training) not implemented in-kernel
        h_out_ref[...] = jnp.maximum(h_bn, 0.0) + h_ref[...]

        # edge BatchNorm folded into a single (scale, shift) affine for pass 2
        mu_c = e_sum_ref[...] * (1.0 / n_edges)
        var_e = e_sq_ref[...] * (1.0 / n_edges) - mu_c * mu_c
        mu_e = e_shift_ref[...] + mu_c
        gamma_e = bn_e_ref[0:1, :]
        beta_e = bn_e_ref[1:2, :]
        scale_e = gamma_e * jax.lax.rsqrt(var_e + BN_EPS)
        e_aff_ref[0:1, :] = scale_e
        e_aff_ref[1:2, :] = beta_e - mu_e * scale_e


def _gatedgcn_edge_finalize_kernel(e_pre_ref, e_in_ref, e_aff_ref, e_out_ref):
    scale = e_aff_ref[0:1, :]
    shift = e_aff_ref[1:2, :]
    e_bn = e_pre_ref[...].astype(jnp.float32) * scale + shift
    e_out_ref[...] = jnp.maximum(e_bn, 0.0) + e_in_ref[...]


def gated_gcn_forward(h, e, src, dst, params, *,
                      mxu_dtype=jnp.bfloat16, edge_tile=512, sub_tile=128,
                      finalize_rows=1024):
    """GatedGCN layer forward (batch_norm=True, residual=True, dropout=0, training)."""
    n, d = h.shape
    e_cnt = e.shape[0]

    npad = _round_up(max(n, 8), 128)                   # lane dim of the one-hot tiles

    # tiling: te = pipelined edge tile (multiple of sub), sub = in-kernel sub-chunk
    sub = max(_UNIT, min(_round_up(sub_tile, _UNIT), _round_up(e_cnt, _UNIT)))
    te = max(sub, min(_round_up(edge_tile, _UNIT), _round_up(e_cnt, sub)))
    te = _round_up(te, sub)
    e_pad_cnt = _round_up(e_cnt, te)
    g_steps = e_pad_cnt // te

    exact = jnp.dtype(mxu_dtype) == jnp.dtype(jnp.float32)
    e_pre_dtype = jnp.float32 if exact else jnp.bfloat16   # halve the pass-2 round trip

    h_pad = jnp.zeros((npad, d), jnp.float32).at[:n].set(h.astype(jnp.float32))
    e_padded = jnp.zeros((e_pad_cnt, d), jnp.float32).at[:e_cnt].set(e.astype(jnp.float32))

    # pad indices with `npad` (outside the iota range) -> all-zero one-hot rows
    src_p = jnp.full((e_pad_cnt,), npad, jnp.int32).at[:e_cnt].set(src.astype(jnp.int32))
    dst_p = jnp.full((e_pad_cnt,), npad, jnp.int32).at[:e_cnt].set(dst.astype(jnp.int32))
    idx = jnp.stack([src_p, dst_p], axis=1).reshape(g_steps, te, 2)

    # fuse the four node-side Linears into a single [D, 4D] matmul: [Wb | Wd | We | Wa]
    w_node = jnp.concatenate(
        [params['wb'], params['wd'], params['we'], params['wa']], axis=1).astype(mxu_dtype)
    b_node = jnp.concatenate(
        [params['bb'], params['bd'], params['be'], params['ba']], axis=1)
    wc = params['wc'].astype(mxu_dtype)

    # explicit VMEM budget (resident scratch/blocks + double-buffered streams)
    mxu_bytes = jnp.dtype(mxu_dtype).itemsize
    pre_bytes = jnp.dtype(e_pre_dtype).itemsize
    resident = (npad * 4 * d * mxu_bytes        # node_proj scratch
                + npad * 2 * d * 4              # [num | den] accumulator
                + 2 * npad * d * 4              # resident h block + h_out block
                + 4 * d * d * mxu_bytes + d * d * mxu_bytes)
    streamed = 2 * te * (2 * 4 + d * 4 + d * pre_bytes)
    vmem_limit = int(min(max(2 * (resident + streamed), 32 * 2**20), 96 * 2**20))

    kernel1 = functools.partial(_gatedgcn_aggregate_kernel,
                                n_nodes=n, n_edges=e_cnt, sub=sub, mxu_dtype=mxu_dtype)

    h_out_pad, e_pre, e_aff = pl.pallas_call(
        kernel1,
        grid=(g_steps,),
        in_specs=[
            pl.BlockSpec((1, te, 2), lambda g: (g, 0, 0)),   # src/dst indices
            pl.BlockSpec((npad, d), lambda g: (0, 0)),       # h (VMEM-resident)
            pl.BlockSpec((te, d), lambda g: (g, 0)),         # e tiles (streamed)
            pl.BlockSpec((d, 4 * d), lambda g: (0, 0)),      # fused node weights
            pl.BlockSpec((1, 4 * d), lambda g: (0, 0)),      # fused node bias
            pl.BlockSpec((d, d), lambda g: (0, 0)),          # Wc
            pl.BlockSpec((1, d), lambda g: (0, 0)),          # bc
            pl.BlockSpec((2, d), lambda g: (0, 0)),          # bn_h [gamma; beta]
            pl.BlockSpec((2, d), lambda g: (0, 0)),          # bn_e [gamma; beta]
        ],
        out_specs=(
            pl.BlockSpec((npad, d), lambda g: (0, 0)),       # h_out (written last tile)
            pl.BlockSpec((te, d), lambda g: (g, 0)),         # pre-BN edge messages
            pl.BlockSpec((2, d), lambda g: (0, 0)),          # edge BN affine (scale, shift)
        ),
        out_shape=(
            jax.ShapeDtypeStruct((npad, d), jnp.float32),
            jax.ShapeDtypeStruct((e_pad_cnt, d), e_pre_dtype),
            jax.ShapeDtypeStruct((2, d), jnp.float32),
        ),
        scratch_shapes=[
            pltpu.VMEM((npad, 4 * d), mxu_dtype),    # fused node projections (resident)
            pltpu.VMEM((npad, 2 * d), jnp.float32),  # [num | den] scatter accumulator
            pltpu.VMEM((1, d), jnp.float32),         # BN shift (first-chunk mean)
            pltpu.VMEM((1, d), jnp.float32),         # sum(e - shift)
            pltpu.VMEM((1, d), jnp.float32),         # sum((e - shift)^2)
        ],
        compiler_params=pltpu.CompilerParams(
            dimension_semantics=("arbitrary",),       # edge axis is a reduction
            vmem_limit_bytes=vmem_limit),
    )(idx, h_pad, e_padded, w_node, b_node, wc, params['bc'],
      params['bn_h'], params['bn_e'])

    # ---- pass 2: edge BN affine + ReLU + residual (pure HBM streaming) ----
    # Lane-dense view: (E_pad, d) -> (E_pad*d/128, 128) row-major reshape (free),
    # so d<128 does not force masked partial stores.
    lane_dense = (d < 128) and (128 % d == 0) and ((e_pad_cnt * d) % 128 == 0)
    if lane_dense:
        rows, width = e_pad_cnt * d // 128, 128
        e_pre2 = e_pre.reshape(rows, width)
        e_in2 = e_padded.reshape(rows, width)
        aff2 = jnp.tile(e_aff, (1, width // d))
    else:
        rows, width = e_pad_cnt, d
        e_pre2, e_in2, aff2 = e_pre, e_padded, e_aff
    tile2 = _largest_tile(rows, max(_UNIT, finalize_rows))

    e_out2 = pl.pallas_call(
        _gatedgcn_edge_finalize_kernel,
        grid=(rows // tile2,),
        in_specs=[
            pl.BlockSpec((tile2, width), lambda g: (g, 0)),
            pl.BlockSpec((tile2, width), lambda g: (g, 0)),
            pl.BlockSpec((2, width), lambda g: (0, 0)),
        ],
        out_specs=pl.BlockSpec((tile2, width), lambda g: (g, 0)),
        out_shape=jax.ShapeDtypeStruct((rows, width), jnp.float32),
        compiler_params=pltpu.CompilerParams(
            dimension_semantics=("parallel",)),       # independent tiles -> megacore
    )(e_pre2, e_in2, aff2)

    e_out_pad = e_out2.reshape(e_pad_cnt, d)
    return h_out_pad[:n], e_out_pad[:e_cnt]


def reference_forward(h, e, src, dst, params):
    """Pure-JAX reference of the same forward semantics (for correctness check)."""
    def lin(x, w, b):
        return x @ w + b
    Ah = lin(h, params['wa'], params['ba'])
    Bh = lin(h, params['wb'], params['bb'])
    Dh = lin(h, params['wd'], params['bd'])
    Eh = lin(h, params['we'], params['be'])
    Ce = lin(e, params['wc'], params['bc'])
    e_new = Ce + Dh[src] + Eh[dst]
    sigma = jax.nn.sigmoid(e_new)
    N = h.shape[0]
    num = jnp.zeros((N, Ah.shape[1]), jnp.float32).at[dst].add(sigma * Bh[src])
    den = jnp.zeros((N, Ah.shape[1]), jnp.float32).at[dst].add(sigma)
    h_new = Ah + num / (den + AGG_EPS)

    def bn(x, p):
        mu = jnp.mean(x, axis=0, keepdims=True)
        var = jnp.mean((x - mu) ** 2, axis=0, keepdims=True)
        return p[0:1] * (x - mu) / jnp.sqrt(var + BN_EPS) + p[1:2]

    h_new = jax.nn.relu(bn(h_new, params['bn_h'])) + h
    e_new = jax.nn.relu(bn(e_new, params['bn_e'])) + e
    return h_new, e_new


def init_params(key, din, dout):
    """PyTorch-style init: Linear W/b ~ U(-1/sqrt(din), 1/sqrt(din)); BN gamma=1, beta=0."""
    k = 1.0 / np.sqrt(din)
    names = ['a', 'b', 'c', 'd', 'e']
    keys = jax.random.split(key, 2 * len(names))
    params = {}
    for i, nm in enumerate(names):
        params['w' + nm] = jax.random.uniform(keys[2 * i], (din, dout), jnp.float32, -k, k)
        params['b' + nm] = jax.random.uniform(keys[2 * i + 1], (1, dout), jnp.float32, -k, k)
    bn_init = jnp.stack([jnp.ones((dout,), jnp.float32),
                         jnp.zeros((dout,), jnp.float32)], axis=0)  # [2, D]
    params['bn_h'] = bn_init
    params['bn_e'] = bn_init
    return params


if __name__ == "__main__":
    N, E, D = 16, 56, 32          # nodes, edges, input_dim == output_dim (residual on)
    key = jax.random.PRNGKey(0)
    k_h, k_e, k_edge, k_param = jax.random.split(key, 4)

    h = jax.random.normal(k_h, (N, D), jnp.float32)
    e = jax.random.normal(k_e, (E, D), jnp.float32)

    # graph: ring edges guarantee in-degree >= 1 for every node, plus random edges
    ring_src = jnp.arange(N, dtype=jnp.int32)
    ring_dst = (ring_src + 1) % N
    rand_edges = jax.random.randint(k_edge, (2, E - N), 0, N, jnp.int32)
    src = jnp.concatenate([ring_src, rand_edges[0]])
    dst = jnp.concatenate([ring_dst, rand_edges[1]])

    params = init_params(k_param, D, D)

    # exact path (f32 MXU operands): tight structural-correctness check.
    # small tiles -> 2 grid steps x 2 sub-chunks + 8 padded edges: exercises
    # init / sub-chunk accumulate / finalize and the padding masks.
    h_f32, e_f32 = gated_gcn_forward(h, e, src, dst, params,
                                     mxu_dtype=jnp.float32, edge_tile=32, sub_tile=16)
    # fast path (bf16 MXU operands + bf16 e_pre round-trip, f32 accumulation).
    h_bf16, e_bf16 = gated_gcn_forward(h, e, src, dst, params,
                                       mxu_dtype=jnp.bfloat16, edge_tile=32, sub_tile=16)
    # default (large-tile) configuration: single edge tile, lane-dense pass 2.
    h_def, e_def = gated_gcn_forward(h, e, src, dst, params)
    jax.block_until_ready((h_f32, e_f32, h_bf16, e_bf16, h_def, e_def))

    h_ref, e_ref = reference_forward(h, e, src, dst, params)
    np.testing.assert_allclose(np.asarray(h_f32), np.asarray(h_ref), rtol=2e-3, atol=2e-3)
    np.testing.assert_allclose(np.asarray(e_f32), np.asarray(e_ref), rtol=2e-3, atol=2e-3)
    # bf16 MXU operands + bf16 e_pre storage round to ~3 decimal digits, so the
    # fast paths are validated with a correspondingly looser tolerance.
    np.testing.assert_allclose(np.asarray(h_bf16), np.asarray(h_ref), rtol=1e-1, atol=1e-1)
    np.testing.assert_allclose(np.asarray(e_bf16), np.asarray(e_ref), rtol=1e-1, atol=1e-1)
    np.testing.assert_allclose(np.asarray(h_def), np.asarray(h_ref), rtol=1e-1, atol=1e-1)
    np.testing.assert_allclose(np.asarray(e_def), np.asarray(e_ref), rtol=1e-1, atol=1e-1)

    print("KERNEL_OK")
</pallas_src>

<mosaic_0001>
module attributes {stable_mosaic.version = 11 : i64} {
  func.func @_gatedgcn_aggregate_kernel(%arg0: i32, %arg1: memref<1x32x2xi32, #tpu.memory_space<vmem>>, %arg2: memref<128x32xf32, #tpu.memory_space<vmem>>, %arg3: memref<32x32xf32, #tpu.memory_space<vmem>>, %arg4: memref<32x128xf32, #tpu.memory_space<vmem>>, %arg5: memref<1x128xf32, #tpu.memory_space<vmem>>, %arg6: memref<32x32xf32, #tpu.memory_space<vmem>>, %arg7: memref<1x32xf32, #tpu.memory_space<vmem>>, %arg8: memref<2x32xf32, #tpu.memory_space<vmem>>, %arg9: memref<2x32xf32, #tpu.memory_space<vmem>>, %arg10: memref<128x32xf32, #tpu.memory_space<vmem>>, %arg11: memref<32x32xf32, #tpu.memory_space<vmem>>, %arg12: memref<2x32xf32, #tpu.memory_space<vmem>>, %arg13: memref<128x128xf32, #tpu.memory_space<vmem>>, %arg14: memref<128x64xf32, #tpu.memory_space<vmem>>, %arg15: memref<1x32xf32, #tpu.memory_space<vmem>>, %arg16: memref<1x32xf32, #tpu.memory_space<vmem>>, %arg17: memref<1x32xf32, #tpu.memory_space<vmem>>) attributes {dimension_semantics = [#tpu.dimension_semantics<arbitrary>], iteration_bounds = array<i64: 2>, scalar_prefetch = 0 : i64, scratch_operands = 5 : i64, tpu.core_type = #tpu.core_type<tc>, window_params = [{transform_indices = @transform_0, window_bounds = array<i64: 1, 32, 2>}, {pipeline_mode = #tpu.pipeline_mode<synchronous>, transform_indices = @transform_1, window_bounds = array<i64: 128, 32>}, {transform_indices = @transform_2, window_bounds = array<i64: 32, 32>}, {pipeline_mode = #tpu.pipeline_mode<synchronous>, transform_indices = @transform_3, window_bounds = array<i64: 32, 128>}, {pipeline_mode = #tpu.pipeline_mode<synchronous>, transform_indices = @transform_4, window_bounds = array<i64: 1, 128>}, {pipeline_mode = #tpu.pipeline_mode<synchronous>, transform_indices = @transform_5, window_bounds = array<i64: 32, 32>}, {pipeline_mode = #tpu.pipeline_mode<synchronous>, transform_indices = @transform_6, window_bounds = array<i64: 1, 32>}, {pipeline_mode = #tpu.pipeline_mode<synchronous>, transform_indices = @transform_7, window_bounds = array<i64: 2, 32>}, {pipeline_mode = #tpu.pipeline_mode<synchronous>, transform_indices = @transform_8, window_bounds = array<i64: 2, 32>}, {pipeline_mode = #tpu.pipeline_mode<synchronous>, transform_indices = @transform_9, window_bounds = array<i64: 128, 32>}, {transform_indices = @transform_10, window_bounds = array<i64: 32, 32>}, {pipeline_mode = #tpu.pipeline_mode<synchronous>, transform_indices = @transform_11, window_bounds = array<i64: 2, 32>}]} {
    %c0_i32 = arith.constant 0 : i32
    %0 = arith.cmpi eq, %arg0, %c0_i32 : i32
    %1 = arith.extui %0 : i1 to i32
    %c0_i32_0 = arith.constant 0 : i32
    %2 = arith.cmpi ne, %1, %c0_i32_0 : i32
    scf.if %2 {
      %cst_83 = arith.constant 0.000000e+00 : f32
      %159 = vector.broadcast %cst_83 : f32 to vector<128x64xf32>
      %c0_84 = arith.constant 0 : index
      %c0_85 = arith.constant 0 : index
      %160 = vector.load %arg14[%c0_84, %c0_85] : memref<128x64xf32, #tpu.memory_space<vmem>>, vector<128x64xf32>
      tpu.vector_store %arg14[%c0_84, %c0_85], %159 {strides = array<i32>} : memref<128x64xf32, #tpu.memory_space<vmem>>, vector<128x64xf32>,
      %cst_86 = arith.constant 0.000000e+00 : f32
      %161 = vector.broadcast %cst_86 : f32 to vector<1x32xf32>
      %c0_87 = arith.constant 0 : index
      %c0_88 = arith.constant 0 : index
      %162 = vector.load %arg16[%c0_87, %c0_88] : memref<1x32xf32, #tpu.memory_space<vmem>>, vector<1x32xf32>
      tpu.vector_store %arg16[%c0_87, %c0_88], %161 {strides = array<i32>} : memref<1x32xf32, #tpu.memory_space<vmem>>, vector<1x32xf32>,
      %cst_89 = arith.constant 0.000000e+00 : f32
      %163 = vector.broadcast %cst_89 : f32 to vector<1x32xf32>
      %c0_90 = arith.constant 0 : index
      %c0_91 = arith.constant 0 : index
      %164 = vector.load %arg17[%c0_90, %c0_91] : memref<1x32xf32, #tpu.memory_space<vmem>>, vector<1x32xf32>
      tpu.vector_store %arg17[%c0_90, %c0_91], %163 {strides = array<i32>} : memref<1x32xf32, #tpu.memory_space<vmem>>, vector<1x32xf32>,
      %c0_92 = arith.constant 0 : index
      %c0_93 = arith.constant 0 : index
      %165 = vector.load %arg2[%c0_92, %c0_93] : memref<128x32xf32, #tpu.memory_space<vmem>>, vector<128x32xf32>
      %c0_94 = arith.constant 0 : index
      %c0_95 = arith.constant 0 : index
      %166 = vector.load %arg4[%c0_94, %c0_95] : memref<32x128xf32, #tpu.memory_space<vmem>>, vector<32x128xf32>
      %cst_96 = arith.constant dense<0.000000e+00> : vector<128x128xf32>
      %167 = tpu.matmul %165, %166, %cst_96 {dimension_numbers = #tpu.dot_dimension_numbers<[1], [0], [0], [1], [0, 0, 1, 1], [], []>} : vector<128x32xf32>, vector<32x128xf32>, vector<128x128xf32> -> vector<128x128xf32>
      %c0_97 = arith.constant 0 : index
      %c0_98 = arith.constant 0 : index
      %168 = vector.load %arg5[%c0_97, %c0_98] : memref<1x128xf32, #tpu.memory_space<vmem>>, vector<1x128xf32>
      %169 = vector.broadcast %168 : vector<1x128xf32> to vector<128x128xf32>
      %170 = arith.addf %167, %169 : vector<128x128xf32>
      %c0_99 = arith.constant 0 : index
      %c0_100 = arith.constant 0 : index
      %171 = vector.load %arg13[%c0_99, %c0_100] : memref<128x128xf32, #tpu.memory_space<vmem>>, vector<128x128xf32>
      tpu.vector_store %arg13[%c0_99, %c0_100], %170 {strides = array<i32>} : memref<128x128xf32, #tpu.memory_space<vmem>>, vector<128x128xf32>,
    } else {
    }
    %c0 = arith.constant 0 : index
    %c0_1 = arith.constant 0 : index
    %3 = vector.load %arg13[%c0, %c0_1] : memref<128x128xf32, #tpu.memory_space<vmem>>, vector<128x128xf32>
    %c0_i32_2 = arith.constant 0 : i32
    %c16_i32 = arith.constant 16 : i32
    %4 = arith.muli %c0_i32_2, %c16_i32 : i32
    %5 = tpu.assume_multiple %4, 16 : i32
    %c0_3 = arith.constant 0 : index
    %6 = arith.index_cast %5 : i32 to index
    %c0_4 = arith.constant 0 : index
    %7 = vector.load %arg1[%c0_3, %6, %c0_4] : memref<1x32x2xi32, #tpu.memory_space<vmem>>, vector<1x16x2xi32>
    %8 = vector.shape_cast %7 : vector<1x16x2xi32> to vector<16x2xi32>
    %9 = vector.extract_strided_slice %8 {offsets = [0, 0], sizes = [16, 1], strides = [1, 1]} : vector<16x2xi32> to vector<16x1xi32>
    %10 = vector.extract_strided_slice %8 {offsets = [0, 1], sizes = [16, 1], strides = [1, 1]} : vector<16x2xi32> to vector<16x1xi32>
    %11 = tpu.iota {dimensions = array<i32: 1>} : vector<16x128xi32>
    %12 = vector.broadcast %9 : vector<16x1xi32> to vector<16x128xi32>
    %13 = arith.cmpi eq, %11, %12 : vector<16x128xi32>
    %cst = arith.constant 1.000000e+00 : f32
    %cst_5 = arith.constant 0.000000e+00 : f32
    %14 = vector.broadcast %cst : f32 to vector<16x128xf32>
    %15 = vector.broadcast %cst_5 : f32 to vector<16x128xf32>
    %16 = arith.select %13, %14, %15 : vector<16x128xi1>, vector<16x128xf32>
    %17 = vector.broadcast %10 : vector<16x1xi32> to vector<16x128xi32>
    %18 = arith.cmpi eq, %11, %17 : vector<16x128xi32>
    %cst_6 = arith.constant 1.000000e+00 : f32
    %cst_7 = arith.constant 0.000000e+00 : f32
    %19 = vector.broadcast %cst_6 : f32 to vector<16x128xf32>
    %20 = vector.broadcast %cst_7 : f32 to vector<16x128xf32>
    %21 = arith.select %18, %19, %20 : vector<16x128xi1>, vector<16x128xf32>
    %cst_8 = arith.constant dense<0.000000e+00> : vector<16x128xf32>
    %22 = tpu.matmul %16, %3, %cst_8 {dimension_numbers = #tpu.dot_dimension_numbers<[1], [0], [0], [1], [0, 0, 1, 1], [], []>} : vector<16x128xf32>, vector<128x128xf32>, vector<16x128xf32> -> vector<16x128xf32>
    %cst_9 = arith.constant dense<0.000000e+00> : vector<16x128xf32>
    %23 = tpu.matmul %21, %3, %cst_9 {dimension_numbers = #tpu.dot_dimension_numbers<[1], [0], [0], [1], [0, 0, 1, 1], [], []>} : vector<16x128xf32>, vector<128x128xf32>, vector<16x128xf32> -> vector<16x128xf32>
    %24 = vector.extract_strided_slice %22 {offsets = [0, 0], sizes = [16, 32], strides = [1, 1]} : vector<16x128xf32> to vector<16x32xf32>
    %25 = vector.extract_strided_slice %22 {offsets = [0, 32], sizes = [16, 32], strides = [1, 1]} : vector<16x128xf32> to vector<16x32xf32>
    %26 = vector.extract_strided_slice %23 {offsets = [0, 64], sizes = [16, 32], strides = [1, 1]} : vector<16x128xf32> to vector<16x32xf32>
    %27 = arith.index_cast %5 : i32 to index
    %c0_10 = arith.constant 0 : index
    %28 = vector.load %arg3[%27, %c0_10] : memref<32x32xf32, #tpu.memory_space<vmem>>, vector<16x32xf32>
    %c0_11 = arith.constant 0 : index
    %c0_12 = arith.constant 0 : index
    %29 = vector.load %arg6[%c0_11, %c0_12] : memref<32x32xf32, #tpu.memory_space<vmem>>, vector<32x32xf32>
    %cst_13 = arith.constant dense<0.000000e+00> : vector<16x32xf32>
    %30 = tpu.matmul %28, %29, %cst_13 {dimension_numbers = #tpu.dot_dimension_numbers<[1], [0], [0], [1], [0, 0, 1, 1], [], []>} : vector<16x32xf32>, vector<32x32xf32>, vector<16x32xf32> -> vector<16x32xf32>
    %c0_14 = arith.constant 0 : index
    %c0_15 = arith.constant 0 : index
    %31 = vector.load %arg7[%c0_14, %c0_15] : memref<1x32xf32, #tpu.memory_space<vmem>>, vector<1x32xf32>
    %32 = vector.broadcast %31 : vector<1x32xf32> to vector<16x32xf32>
    %33 = arith.addf %30, %32 : vector<16x32xf32>
    %34 = arith.addf %33, %25 : vector<16x32xf32>
    %35 = arith.addf %34, %26 : vector<16x32xf32>
    %36 = arith.index_cast %5 : i32 to index
    %c0_16 = arith.constant 0 : index
    %37 = vector.load %arg11[%36, %c0_16] : memref<32x32xf32, #tpu.memory_space<vmem>>, vector<16x32xf32>
    tpu.vector_store %arg11[%36, %c0_16], %35 {strides = array<i32>} : memref<32x32xf32, #tpu.memory_space<vmem>>, vector<16x32xf32>,
    %38 = arith.negf %35 : vector<16x32xf32>
    %39 = math.exp %38 : vector<16x32xf32>
    %cst_17 = arith.constant 1.000000e+00 : f32
    %40 = vector.broadcast %cst_17 : f32 to vector<16x32xf32>
    %41 = arith.addf %40, %39 : vector<16x32xf32>
    %42 = arith.divf %40, %41 : vector<16x32xf32>
    %43 = arith.mulf %42, %24 : vector<16x32xf32>
    %44 = tpu.concatenate %43, %42 in 1 : vector<16x32xf32>, vector<16x32xf32> -> vector<16x64xf32>
    %c0_18 = arith.constant 0 : index
    %c0_19 = arith.constant 0 : index
    %45 = vector.load %arg14[%c0_18, %c0_19] : memref<128x64xf32, #tpu.memory_space<vmem>>, vector<128x64xf32>
    %cst_20 = arith.constant dense<0.000000e+00> : vector<128x64xf32>
    %46 = tpu.matmul %21, %44, %cst_20 {dimension_numbers = #tpu.dot_dimension_numbers<[0], [0], [1], [1], [0, 1, 1, 1], [], []>} : vector<16x128xf32>, vector<16x64xf32>, vector<128x64xf32> -> vector<128x64xf32>
    %47 = arith.addf %45, %46 : vector<128x64xf32>
    %c0_21 = arith.constant 0 : index
    %c0_22 = arith.constant 0 : index
    %48 = vector.load %arg14[%c0_21, %c0_22] : memref<128x64xf32, #tpu.memory_space<vmem>>, vector<128x64xf32>
    tpu.vector_store %arg14[%c0_21, %c0_22], %47 {strides = array<i32>} : memref<128x64xf32, #tpu.memory_space<vmem>>, vector<128x64xf32>,
    %c32_i32 = arith.constant 32 : i32
    %49 = arith.muli %arg0, %c32_i32 : i32
    %50 = arith.addi %49, %5 : i32
    %51 = tpu.iota {dimensions = array<i32: 0>} : vector<16x1xi32>
    %52 = vector.broadcast %50 : i32 to vector<16x1xi32>
    %53 = arith.addi %51, %52 : vector<16x1xi32>
    %c56_i32 = arith.constant 56 : i32
    %54 = vector.broadcast %c56_i32 : i32 to vector<16x1xi32>
    %55 = arith.cmpi slt, %53, %54 : vector<16x1xi32>
    %cst_23 = arith.constant 1.000000e+00 : f32
    %cst_24 = arith.constant 0.000000e+00 : f32
    %56 = vector.broadcast %cst_23 : f32 to vector<16x1xf32>
    %57 = vector.broadcast %cst_24 : f32 to vector<16x1xf32>
    %58 = arith.select %55, %56, %57 : vector<16x1xi1>, vector<16x1xf32>
    %c0_i32_25 = arith.constant 0 : i32
    %59 = arith.cmpi eq, %arg0, %c0_i32_25 : i32
    %c0_i32_26 = arith.constant 0 : i32
    %60 = arith.cmpi eq, %c0_i32_2, %c0_i32_26 : i32
    %61 = arith.andi %59, %60 : i1
    %62 = arith.extui %61 : i1 to i32
    %c0_i32_27 = arith.constant 0 : i32
    %63 = arith.cmpi ne, %62, %c0_i32_27 : i32
    scf.if %63 {
      %159 = vector.broadcast %58 : vector<16x1xf32> to vector<16x32xf32>
      %160 = arith.mulf %35, %159 : vector<16x32xf32>
      %cst_83 = arith.constant dense<0.000000e+00> : vector<32xf32>
      %161 = vector.multi_reduction <add>, %160, %cst_83 [0] : vector<16x32xf32> to vector<32xf32>
      %162 = vector.shape_cast %161 : vector<32xf32> to vector<1x32xf32>
      %cst_84 = arith.constant 6.250000e-02 : f32
      %163 = vector.broadcast %cst_84 : f32 to vector<1x32xf32>
      %164 = arith.mulf %162, %163 : vector<1x32xf32>
      %c0_85 = arith.constant 0 : index
      %c0_86 = arith.constant 0 : index
      %165 = vector.load %arg15[%c0_85, %c0_86] : memref<1x32xf32, #tpu.memory_space<vmem>>, vector<1x32xf32>
      tpu.vector_store %arg15[%c0_85, %c0_86], %164 {strides = array<i32>} : memref<1x32xf32, #tpu.memory_space<vmem>>, vector<1x32xf32>,
    } else {
    }
    %c0_28 = arith.constant 0 : index
    %c0_29 = arith.constant 0 : index
    %64 = vector.load %arg15[%c0_28, %c0_29] : memref<1x32xf32, #tpu.memory_space<vmem>>, vector<1x32xf32>
    %65 = vector.broadcast %64 : vector<1x32xf32> to vector<16x32xf32>
    %66 = arith.subf %35, %65 : vector<16x32xf32>
    %67 = vector.broadcast %58 : vector<16x1xf32> to vector<16x32xf32>
    %68 = arith.mulf %66, %67 : vector<16x32xf32>
    %c0_30 = arith.constant 0 : index
    %c0_31 = arith.constant 0 : index
    %69 = vector.load %arg16[%c0_30, %c0_31] : memref<1x32xf32, #tpu.memory_space<vmem>>, vector<1x32xf32>
    %cst_32 = arith.constant dense<0.000000e+00> : vector<32xf32>
    %70 = vector.multi_reduction <add>, %68, %cst_32 [0] : vector<16x32xf32> to vector<32xf32>
    %71 = vector.shape_cast %70 : vector<32xf32> to vector<1x32xf32>
    %72 = arith.addf %69, %71 : vector<1x32xf32>
    %c0_33 = arith.constant 0 : index
    %c0_34 = arith.constant 0 : index
    %73 = vector.load %arg16[%c0_33, %c0_34] : memref<1x32xf32, #tpu.memory_space<vmem>>, vector<1x32xf32>
    tpu.vector_store %arg16[%c0_33, %c0_34], %72 {strides = array<i32>} : memref<1x32xf32, #tpu.memory_space<vmem>>, vector<1x32xf32>,
    %c0_35 = arith.constant 0 : index
    %c0_36 = arith.constant 0 : index
    %74 = vector.load %arg17[%c0_35, %c0_36] : memref<1x32xf32, #tpu.memory_space<vmem>>, vector<1x32xf32>
    %75 = arith.mulf %68, %68 : vector<16x32xf32>
    %cst_37 = arith.constant dense<0.000000e+00> : vector<32xf32>
    %76 = vector.multi_reduction <add>, %75, %cst_37 [0] : vector<16x32xf32> to vector<32xf32>
    %77 = vector.shape_cast %76 : vector<32xf32> to vector<1x32xf32>
    %78 = arith.addf %74, %77 : vector<1x32xf32>
    %c0_38 = arith.constant 0 : index
    %c0_39 = arith.constant 0 : index
    %79 = vector.load %arg17[%c0_38, %c0_39] : memref<1x32xf32, #tpu.memory_space<vmem>>, vector<1x32xf32>
    tpu.vector_store %arg17[%c0_38, %c0_39], %78 {strides = array<i32>} : memref<1x32xf32, #tpu.memory_space<vmem>>, vector<1x32xf32>,
    %c1_i32 = arith.constant 1 : i32
    %c16_i32_40 = arith.constant 16 : i32
    %80 = arith.muli %c1_i32, %c16_i32_40 : i32
    %81 = tpu.assume_multiple %80, 16 : i32
    %c0_41 = arith.constant 0 : index
    %82 = arith.index_cast %81 : i32 to index
    %c0_42 = arith.constant 0 : index
    %83 = vector.load %arg1[%c0_41, %82, %c0_42] : memref<1x32x2xi32, #tpu.memory_space<vmem>>, vector<1x16x2xi32>
    %84 = vector.shape_cast %83 : vector<1x16x2xi32> to vector<16x2xi32>
    %85 = vector.extract_strided_slice %84 {offsets = [0, 0], sizes = [16, 1], strides = [1, 1]} : vector<16x2xi32> to vector<16x1xi32>
    %86 = vector.extract_strided_slice %84 {offsets = [0, 1], sizes = [16, 1], strides = [1, 1]} : vector<16x2xi32> to vector<16x1xi32>
    %87 = tpu.iota {dimensions = array<i32: 1>} : vector<16x128xi32>
    %88 = vector.broadcast %85 : vector<16x1xi32> to vector<16x128xi32>
    %89 = arith.cmpi eq, %87, %88 : vector<16x128xi32>
    %cst_43 = arith.constant 1.000000e+00 : f32
    %cst_44 = arith.constant 0.000000e+00 : f32
    %90 = vector.broadcast %cst_43 : f32 to vector<16x128xf32>
    %91 = vector.broadcast %cst_44 : f32 to vector<16x128xf32>
    %92 = arith.select %89, %90, %91 : vector<16x128xi1>, vector<16x128xf32>
    %93 = vector.broadcast %86 : vector<16x1xi32> to vector<16x128xi32>
    %94 = arith.cmpi eq, %87, %93 : vector<16x128xi32>
    %cst_45 = arith.constant 1.000000e+00 : f32
    %cst_46 = arith.constant 0.000000e+00 : f32
    %95 = vector.broadcast %cst_45 : f32 to vector<16x128xf32>
    %96 = vector.broadcast %cst_46 : f32 to vector<16x128xf32>
    %97 = arith.select %94, %95, %96 : vector<16x128xi1>, vector<16x128xf32>
    %cst_47 = arith.constant dense<0.000000e+00> : vector<16x128xf32>
    %98 = tpu.matmul %92, %3, %cst_47 {dimension_numbers = #tpu.dot_dimension_numbers<[1], [0], [0], [1], [0, 0, 1, 1], [], []>} : vector<16x128xf32>, vector<128x128xf32>, vector<16x128xf32> -> vector<16x128xf32>
    %cst_48 = arith.constant dense<0.000000e+00> : vector<16x128xf32>
    %99 = tpu.matmul %97, %3, %cst_48 {dimension_numbers = #tpu.dot_dimension_numbers<[1], [0], [0], [1], [0, 0, 1, 1], [], []>} : vector<16x128xf32>, vector<128x128xf32>, vector<16x128xf32> -> vector<16x128xf32>
    %100 = vector.extract_strided_slice %98 {offsets = [0, 0], sizes = [16, 32], strides = [1, 1]} : vector<16x128xf32> to vector<16x32xf32>
    %101 = vector.extract_strided_slice %98 {offsets = [0, 32], sizes = [16, 32], strides = [1, 1]} : vector<16x128xf32> to vector<16x32xf32>
    %102 = vector.extract_strided_slice %99 {offsets = [0, 64], sizes = [16, 32], strides = [1, 1]} : vector<16x128xf32> to vector<16x32xf32>
    %103 = arith.index_cast %81 : i32 to index
    %c0_49 = arith.constant 0 : index
    %104 = vector.load %arg3[%103, %c0_49] : memref<32x32xf32, #tpu.memory_space<vmem>>, vector<16x32xf32>
    %c0_50 = arith.constant 0 : index
    %c0_51 = arith.constant 0 : index
    %105 = vector.load %arg6[%c0_50, %c0_51] : memref<32x32xf32, #tpu.memory_space<vmem>>, vector<32x32xf32>
    %cst_52 = arith.constant dense<0.000000e+00> : vector<16x32xf32>
    %106 = tpu.matmul %104, %105, %cst_52 {dimension_numbers = #tpu.dot_dimension_numbers<[1], [0], [0], [1], [0, 0, 1, 1], [], []>} : vector<16x32xf32>, vector<32x32xf32>, vector<16x32xf32> -> vector<16x32xf32>
    %c0_53 = arith.constant 0 : index
    %c0_54 = arith.constant 0 : index
    %107 = vector.load %arg7[%c0_53, %c0_54] : memref<1x32xf32, #tpu.memory_space<vmem>>, vector<1x32xf32>
    %108 = vector.broadcast %107 : vector<1x32xf32> to vector<16x32xf32>
    %109 = arith.addf %106, %108 : vector<16x32xf32>
    %110 = arith.addf %109, %101 : vector<16x32xf32>
    %111 = arith.addf %110, %102 : vector<16x32xf32>
    %112 = arith.index_cast %81 : i32 to index
    %c0_55 = arith.constant 0 : index
    %113 = vector.load %arg11[%112, %c0_55] : memref<32x32xf32, #tpu.memory_space<vmem>>, vector<16x32xf32>
    tpu.vector_store %arg11[%112, %c0_55], %111 {strides = array<i32>} : memref<32x32xf32, #tpu.memory_space<vmem>>, vector<16x32xf32>,
    %114 = arith.negf %111 : vector<16x32xf32>
    %115 = math.exp %114 : vector<16x32xf32>
    %cst_56 = arith.constant 1.000000e+00 : f32
    %116 = vector.broadcast %cst_56 : f32 to vector<16x32xf32>
    %117 = arith.addf %116, %115 : vector<16x32xf32>
    %118 = arith.divf %116, %117 : vector<16x32xf32>
    %119 = arith.mulf %118, %100 : vector<16x32xf32>
    %120 = tpu.concatenate %119, %118 in 1 : vector<16x32xf32>, vector<16x32xf32> -> vector<16x64xf32>
    %c0_57 = arith.constant 0 : index
    %c0_58 = arith.constant 0 : index
    %121 = vector.load %arg14[%c0_57, %c0_58] : memref<128x64xf32, #tpu.memory_space<vmem>>, vector<128x64xf32>
    %cst_59 = arith.constant dense<0.000000e+00> : vector<128x64xf32>
    %122 = tpu.matmul %97, %120, %cst_59 {dimension_numbers = #tpu.dot_dimension_numbers<[0], [0], [1], [1], [0, 1, 1, 1], [], []>} : vector<16x128xf32>, vector<16x64xf32>, vector<128x64xf32> -> vector<128x64xf32>
    %123 = arith.addf %121, %122 : vector<128x64xf32>
    %c0_60 = arith.constant 0 : index
    %c0_61 = arith.constant 0 : index
    %124 = vector.load %arg14[%c0_60, %c0_61] : memref<128x64xf32, #tpu.memory_space<vmem>>, vector<128x64xf32>
    tpu.vector_store %arg14[%c0_60, %c0_61], %123 {strides = array<i32>} : memref<128x64xf32, #tpu.memory_space<vmem>>, vector<128x64xf32>,
    %c32_i32_62 = arith.constant 32 : i32
    %125 = arith.muli %arg0, %c32_i32_62 : i32
    %126 = arith.addi %125, %81 : i32
    %127 = tpu.iota {dimensions = array<i32: 0>} : vector<16x1xi32>
    %128 = vector.broadcast %126 : i32 to vector<16x1xi32>
    %129 = arith.addi %127, %128 : vector<16x1xi32>
    %c56_i32_63 = arith.constant 56 : i32
    %130 = vector.broadcast %c56_i32_63 : i32 to vector<16x1xi32>
    %131 = arith.cmpi slt, %129, %130 : vector<16x1xi32>
    %cst_64 = arith.constant 1.000000e+00 : f32
    %cst_65 = arith.constant 0.000000e+00 : f32
    %132 = vector.broadcast %cst_64 : f32 to vector<16x1xf32>
    %133 = vector.broadcast %cst_65 : f32 to vector<16x1xf32>
    %134 = arith.select %131, %132, %133 : vector<16x1xi1>, vector<16x1xf32>
    %c0_i32_66 = arith.constant 0 : i32
    %135 = arith.cmpi eq, %arg0, %c0_i32_66 : i32
    %c0_i32_67 = arith.constant 0 : i32
    %136 = arith.cmpi eq, %c1_i32, %c0_i32_67 : i32
    %137 = arith.andi %135, %136 : i1
    %138 = arith.extui %137 : i1 to i32
    %c0_i32_68 = arith.constant 0 : i32
    %139 = arith.cmpi ne, %138, %c0_i32_68 : i32
    scf.if %139 {
      %159 = vector.broadcast %134 : vector<16x1xf32> to vector<16x32xf32>
      %160 = arith.mulf %111, %159 : vector<16x32xf32>
      %cst_83 = arith.constant dense<0.000000e+00> : vector<32xf32>
      %161 = vector.multi_reduction <add>, %160, %cst_83 [0] : vector<16x32xf32> to vector<32xf32>
      %162 = vector.shape_cast %161 : vector<32xf32> to vector<1x32xf32>
      %cst_84 = arith.constant 6.250000e-02 : f32
      %163 = vector.broadcast %cst_84 : f32 to vector<1x32xf32>
      %164 = arith.mulf %162, %163 : vector<1x32xf32>
      %c0_85 = arith.constant 0 : index
      %c0_86 = arith.constant 0 : index
      %165 = vector.load %arg15[%c0_85, %c0_86] : memref<1x32xf32, #tpu.memory_space<vmem>>, vector<1x32xf32>
      tpu.vector_store %arg15[%c0_85, %c0_86], %164 {strides = array<i32>} : memref<1x32xf32, #tpu.memory_space<vmem>>, vector<1x32xf32>,
    } else {
    }
    %c0_69 = arith.constant 0 : index
    %c0_70 = arith.constant 0 : index
    %140 = vector.load %arg15[%c0_69, %c0_70] : memref<1x32xf32, #tpu.memory_space<vmem>>, vector<1x32xf32>
    %141 = vector.broadcast %140 : vector<1x32xf32> to vector<16x32xf32>
    %142 = arith.subf %111, %141 : vector<16x32xf32>
    %143 = vector.broadcast %134 : vector<16x1xf32> to vector<16x32xf32>
    %144 = arith.mulf %142, %143 : vector<16x32xf32>
    %c0_71 = arith.constant 0 : index
    %c0_72 = arith.constant 0 : index
    %145 = vector.load %arg16[%c0_71, %c0_72] : memref<1x32xf32, #tpu.memory_space<vmem>>, vector<1x32xf32>
    %cst_73 = arith.constant dense<0.000000e+00> : vector<32xf32>
    %146 = vector.multi_reduction <add>, %144, %cst_73 [0] : vector<16x32xf32> to vector<32xf32>
    %147 = vector.shape_cast %146 : vector<32xf32> to vector<1x32xf32>
    %148 = arith.addf %145, %147 : vector<1x32xf32>
    %c0_74 = arith.constant 0 : index
    %c0_75 = arith.constant 0 : index
    %149 = vector.load %arg16[%c0_74, %c0_75] : memref<1x32xf32, #tpu.memory_space<vmem>>, vector<1x32xf32>
    tpu.vector_store %arg16[%c0_74, %c0_75], %148 {strides = array<i32>} : memref<1x32xf32, #tpu.memory_space<vmem>>, vector<1x32xf32>,
    %c0_76 = arith.constant 0 : index
    %c0_77 = arith.constant 0 : index
    %150 = vector.load %arg17[%c0_76, %c0_77] : memref<1x32xf32, #tpu.memory_space<vmem>>, vector<1x32xf32>
    %151 = arith.mulf %144, %144 : vector<16x32xf32>
    %cst_78 = arith.constant dense<0.000000e+00> : vector<32xf32>
    %152 = vector.multi_reduction <add>, %151, %cst_78 [0] : vector<16x32xf32> to vector<32xf32>
    %153 = vector.shape_cast %152 : vector<32xf32> to vector<1x32xf32>
    %154 = arith.addf %150, %153 : vector<1x32xf32>
    %c0_79 = arith.constant 0 : index
    %c0_80 = arith.constant 0 : index
    %155 = vector.load %arg17[%c0_79, %c0_80] : memref<1x32xf32, #tpu.memory_space<vmem>>, vector<1x32xf32>
    tpu.vector_store %arg17[%c0_79, %c0_80], %154 {strides = array<i32>} : memref<1x32xf32, #tpu.memory_space<vmem>>, vector<1x32xf32>,
    %c2_i32 = arith.constant 2 : i32
    %c1_i32_81 = arith.constant 1 : i32
    %156 = arith.cmpi eq, %arg0, %c1_i32_81 : i32
    %157 = arith.extui %156 : i1 to i32
    %c0_i32_82 = arith.constant 0 : i32
    %158 = arith.cmpi ne, %157, %c0_i32_82 : i32
    scf.if %158 {
      %c0_83 = arith.constant 0 : index
      %c0_84 = arith.constant 0 : index
      %159 = vector.load %arg14[%c0_83, %c0_84] : memref<128x64xf32, #tpu.memory_space<vmem>>, vector<128x64xf32>
      %160 = vector.extract_strided_slice %159 {offsets = [0, 0], sizes = [128, 32], strides = [1, 1]} : vector<128x64xf32> to vector<128x32xf32>
      %161 = vector.extract_strided_slice %159 {offsets = [0, 32], sizes = [128, 32], strides = [1, 1]} : vector<128x64xf32> to vector<128x32xf32>
      %162 = vector.extract_strided_slice %3 {offsets = [0, 96], sizes = [128, 32], strides = [1, 1]} : vector<128x128xf32> to vector<128x32xf32>
      %cst_85 = arith.constant 9.99999997E-7 : f32
      %163 = vector.broadcast %cst_85 : f32 to vector<128x32xf32>
      %164 = arith.addf %161, %163 : vector<128x32xf32>
      %165 = tpu.reciprocal %164 : vector<128x32xf32> -> vector<128x32xf32>
      %166 = arith.mulf %160, %165 : vector<128x32xf32>
      %167 = arith.addf %162, %166 : vector<128x32xf32>
      %168 = tpu.iota {dimensions = array<i32: 0>} : vector<128x1xi32>
      %c16_i32_86 = arith.constant 16 : i32
      %169 = vector.broadcast %c16_i32_86 : i32 to vector<128x1xi32>
      %170 = arith.cmpi slt, %168, %169 : vector<128x1xi32>
      %cst_87 = arith.constant 1.000000e+00 : f32
      %cst_88 = arith.constant 0.000000e+00 : f32
      %171 = vector.broadcast %cst_87 : f32 to vector<128x1xf32>
      %172 = vector.broadcast %cst_88 : f32 to vector<128x1xf32>
      %173 = arith.select %170, %171, %172 : vector<128x1xi1>, vector<128x1xf32>
      %174 = vector.broadcast %173 : vector<128x1xf32> to vector<128x32xf32>
      %175 = arith.mulf %167, %174 : vector<128x32xf32>
      %cst_89 = arith.constant dense<0.000000e+00> : vector<32xf32>
      %176 = vector.multi_reduction <add>, %175, %cst_89 [0] : vector<128x32xf32> to vector<32xf32>
      %177 = vector.shape_cast %176 : vector<32xf32> to vector<1x32xf32>
      %cst_90 = arith.constant 6.250000e-02 : f32
      %178 = vector.broadcast %cst_90 : f32 to vector<1x32xf32>
      %179 = arith.mulf %177, %178 : vector<1x32xf32>
      %180 = vector.broadcast %179 : vector<1x32xf32> to vector<128x32xf32>
      %181 = arith.subf %167, %180 : vector<128x32xf32>
      %182 = vector.broadcast %173 : vector<128x1xf32> to vector<128x32xf32>
      %183 = arith.mulf %181, %182 : vector<128x32xf32>
      %184 = arith.mulf %183, %183 : vector<128x32xf32>
      %cst_91 = arith.constant dense<0.000000e+00> : vector<32xf32>
      %185 = vector.multi_reduction <add>, %184, %cst_91 [0] : vector<128x32xf32> to vector<32xf32>
      %186 = vector.shape_cast %185 : vector<32xf32> to vector<1x32xf32>
      %cst_92 = arith.constant 6.250000e-02 : f32
      %187 = vector.broadcast %cst_92 : f32 to vector<1x32xf32>
      %188 = arith.mulf %186, %187 : vector<1x32xf32>
      %c0_93 = arith.constant 0 : index
      %c0_94 = arith.constant 0 : index
      %189 = vector.load %arg8[%c0_93, %c0_94] : memref<2x32xf32, #tpu.memory_space<vmem>>, vector<1x32xf32>
      %c1 = arith.constant 1 : index
      %c0_95 = arith.constant 0 : index
      %190 = vector.load %arg8[%c1, %c0_95] : memref<2x32xf32, #tpu.memory_space<vmem>>, vector<1x32xf32>
      %191 = vector.broadcast %179 : vector<1x32xf32> to vector<128x32xf32>
      %192 = arith.subf %167, %191 : vector<128x32xf32>
      %193 = vector.broadcast %189 : vector<1x32xf32> to vector<128x32xf32>
      %194 = arith.mulf %193, %192 : vector<128x32xf32>
      %cst_96 = arith.constant 9.99999974E-6 : f32
      %195 = vector.broadcast %cst_96 : f32 to vector<1x32xf32>
      %196 = arith.addf %188, %195 : vector<1x32xf32>
      %197 = math.rsqrt %196 : vector<1x32xf32>
      %198 = vector.broadcast %197 : vector<1x32xf32> to vector<128x32xf32>
      %199 = arith.mulf %194, %198 : vector<128x32xf32>
      %200 = vector.broadcast %190 : vector<1x32xf32> to vector<128x32xf32>
      %201 = arith.addf %199, %200 : vector<128x32xf32>
      %cst_97 = arith.constant 0.000000e+00 : f32
      %202 = vector.broadcast %cst_97 : f32 to vector<128x32xf32>
      %203 = arith.maximumf %201, %202 : vector<128x32xf32>
      %c0_98 = arith.constant 0 : index
      %c0_99 = arith.constant 0 : index
      %204 = vector.load %arg2[%c0_98, %c0_99] : memref<128x32xf32, #tpu.memory_space<vmem>>, vector<128x32xf32>
      %205 = arith.addf %203, %204 : vector<128x32xf32>
      %c0_100 = arith.constant 0 : index
      %c0_101 = arith.constant 0 : index
      %206 = vector.load %arg10[%c0_100, %c0_101] : memref<128x32xf32, #tpu.memory_space<vmem>>, vector<128x32xf32>
      tpu.vector_store %arg10[%c0_100, %c0_101], %205 {strides = array<i32>} : memref<128x32xf32, #tpu.memory_space<vmem>>, vector<128x32xf32>,
      %c0_102 = arith.constant 0 : index
      %c0_103 = arith.constant 0 : index
      %207 = vector.load %arg16[%c0_102, %c0_103] : memref<1x32xf32, #tpu.memory_space<vmem>>, vector<1x32xf32>
      %cst_104 = arith.constant 0.0178571437 : f32
      %208 = vector.broadcast %cst_104 : f32 to vector<1x32xf32>
      %209 = arith.mulf %207, %208 : vector<1x32xf32>
      %c0_105 = arith.constant 0 : index
      %c0_106 = arith.constant 0 : index
      %210 = vector.load %arg17[%c0_105, %c0_106] : memref<1x32xf32, #tpu.memory_space<vmem>>, vector<1x32xf32>
      %cst_107 = arith.constant 0.0178571437 : f32
      %211 = vector.broadcast %cst_107 : f32 to vector<1x32xf32>
      %212 = arith.mulf %210, %211 : vector<1x32xf32>
      %213 = arith.mulf %209, %209 : vector<1x32xf32>
      %214 = arith.subf %212, %213 : vector<1x32xf32>
      %c0_108 = arith.constant 0 : index
      %c0_109 = arith.constant 0 : index
      %215 = vector.load %arg15[%c0_108, %c0_109] : memref<1x32xf32, #tpu.memory_space<vmem>>, vector<1x32xf32>
      %216 = arith.addf %215, %209 : vector<1x32xf32>
      %c0_110 = arith.constant 0 : index
      %c0_111 = arith.constant 0 : index
      %217 = vector.load %arg9[%c0_110, %c0_111] : memref<2x32xf32, #tpu.memory_space<vmem>>, vector<1x32xf32>
      %c1_112 = arith.constant 1 : index
      %c0_113 = arith.constant 0 : index
      %218 = vector.load %arg9[%c1_112, %c0_113] : memref<2x32xf32, #tpu.memory_space<vmem>>, vector<1x32xf32>
      %cst_114 = arith.constant 9.99999974E-6 : f32
      %219 = vector.broadcast %cst_114 : f32 to vector<1x32xf32>
      %220 = arith.addf %214, %219 : vector<1x32xf32>
      %221 = math.rsqrt %220 : vector<1x32xf32>
      %222 = arith.mulf %217, %221 : vector<1x32xf32>
      %c0_115 = arith.constant 0 : index
      %c0_116 = arith.constant 0 : index
      %223 = vector.load %arg12[%c0_115, %c0_116] : memref<2x32xf32, #tpu.memory_space<vmem>>, vector<1x32xf32>
      tpu.vector_store %arg12[%c0_115, %c0_116], %222 {strides = array<i32>} : memref<2x32xf32, #tpu.memory_space<vmem>>, vector<1x32xf32>,
      %224 = arith.mulf %216, %222 : vector<1x32xf32>
      %225 = arith.subf %218, %224 : vector<1x32xf32>
      %c1_117 = arith.constant 1 : index
      %c0_118 = arith.constant 0 : index
      %226 = vector.load %arg12[%c1_117, %c0_118] : memref<2x32xf32, #tpu.memory_space<vmem>>, vector<1x32xf32>
      tpu.vector_store %arg12[%c1_117, %c0_118], %225 {strides = array<i32>} : memref<2x32xf32, #tpu.memory_space<vmem>>, vector<1x32xf32>,
    } else {
    }
    return
  }
  func.func @transform_0(%arg0: i32) -> (i32, i32, i32) {
    %c0_i32 = arith.constant 0 : i32
    %c0_i32_0 = arith.constant 0 : i32
    %c0_i32_1 = arith.constant 0 : i32
    return %arg0, %c0_i32, %c0_i32_0 : i32, i32, i32
  }
  func.func @transform_1(%arg0: i32) -> (i32, i32) {
    %c0_i32 = arith.constant 0 : i32
    %c0_i32_0 = arith.constant 0 : i32
    %c0_i32_1 = arith.constant 0 : i32
    return %c0_i32, %c0_i32_0 : i32, i32
  }
  func.func @transform_2(%arg0: i32) -> (i32, i32) {
    %c0_i32 = arith.constant 0 : i32
    %c0_i32_0 = arith.constant 0 : i32
    return %arg0, %c0_i32 : i32, i32
  }
  func.func @transform_3(%arg0: i32) -> (i32, i32) {
    %c0_i32 = arith.constant 0 : i32
    %c0_i32_0 = arith.constant 0 : i32
    %c0_i32_1 = arith.constant 0 : i32
    return %c0_i32, %c0_i32_0 : i32, i32
  }
  func.func @transform_4(%arg0: i32) -> (i32, i32) {
    %c0_i32 = arith.constant 0 : i32
    %c0_i32_0 = arith.constant 0 : i32
    %c0_i32_1 = arith.constant 0 : i32
    return %c0_i32, %c0_i32_0 : i32, i32
  }
  func.func @transform_5(%arg0: i32) -> (i32, i32) {
    %c0_i32 = arith.constant 0 : i32
    %c0_i32_0 = arith.constant 0 : i32
    %c0_i32_1 = arith.constant 0 : i32
    return %c0_i32, %c0_i32_0 : i32, i32
  }
  func.func @transform_6(%arg0: i32) -> (i32, i32) {
    %c0_i32 = arith.constant 0 : i32
    %c0_i32_0 = arith.constant 0 : i32
    %c0_i32_1 = arith.constant 0 : i32
    return %c0_i32, %c0_i32_0 : i32, i32
  }
  func.func @transform_7(%arg0: i32) -> (i32, i32) {
    %c0_i32 = arith.constant 0 : i32
    %c0_i32_0 = arith.constant 0 : i32
    %c0_i32_1 = arith.constant 0 : i32
    return %c0_i32, %c0_i32_0 : i32, i32
  }
  func.func @transform_8(%arg0: i32) -> (i32, i32) {
    %c0_i32 = arith.constant 0 : i32
    %c0_i32_0 = arith.constant 0 : i32
    %c0_i32_1 = arith.constant 0 : i32
    return %c0_i32, %c0_i32_0 : i32, i32
  }
  func.func @transform_9(%arg0: i32) -> (i32, i32) {
    %c0_i32 = arith.constant 0 : i32
    %c0_i32_0 = arith.constant 0 : i32
    %c0_i32_1 = arith.constant 0 : i32
    return %c0_i32, %c0_i32_0 : i32, i32
  }
  func.func @transform_10(%arg0: i32) -> (i32, i32) {
    %c0_i32 = arith.constant 0 : i32
    %c0_i32_0 = arith.constant 0 : i32
    return %arg0, %c0_i32 : i32, i32
  }
  func.func @transform_11(%arg0: i32) -> (i32, i32) {
    %c0_i32 = arith.constant 0 : i32
    %c0_i32_0 = arith.constant 0 : i32
    %c0_i32_1 = arith.constant 0 : i32
    return %c0_i32, %c0_i32_0 : i32, i32
  }
}

</mosaic_0001>

<llo_original>
// kernel: tpu_custom_call.1
$region0: #{tpu_custom_call.1}
  #allocation0 [shape = 'u32[]', space=smem, size = 0x4, offset = 0x4, fixed_abs, tag = 'smem constant byte address 0x4 - core index']
  #allocation1 [shape = 'u32[72,128]{1,0:T(1,128)}', space=vmem, size = 0x9000, scoped, tag = 'internal scratch']
  #allocation2 [shape = 'f32[128,128]{1,0:T(8,128)}', space=vmem, size = 0x10000, scoped, tag = 'scratch operand']
  #allocation3 [shape = 'f32[128,64]{1,0:T(8,128)}', space=vmem, size = 0x10000, scoped, tag = 'scratch operand']
  #allocation4 [shape = 'f32[1,32]{1,0:T(1,128)}', space=vmem, size = 0x200, scoped, tag = 'scratch operand']
  #allocation5 [shape = 'f32[1,32]{1,0:T(1,128)}', space=vmem, size = 0x200, scoped, tag = 'scratch operand']
  #allocation6 [shape = 'f32[1,32]{1,0:T(1,128)}', space=vmem, size = 0x200, scoped, tag = 'scratch operand']
  %s0 = inlined_call_operand.vmem [shape: s32[2,32,2], index: 0, kind: input, shape index: {}]
  %s1 = inlined_call_operand.vmem [shape: f32[128,32], index: 1, kind: input, shape index: {}]
  %s2 = inlined_call_operand.vmem [shape: f32[64,32], index: 2, kind: input, shape index: {}]
  %s3 = inlined_call_operand.vmem [shape: f32[32,128], index: 3, kind: input, shape index: {}]
  %s4 = inlined_call_operand.vmem [shape: f32[1,128], index: 4, kind: input, shape index: {}]
  %s5 = inlined_call_operand.vmem [shape: f32[32,32], index: 5, kind: input, shape index: {}]
  %s6 = inlined_call_operand.vmem [shape: f32[1,32], index: 6, kind: input, shape index: {}]
  %s7 = inlined_call_operand.vmem [shape: f32[2,32], index: 7, kind: input, shape index: {}]
  %s8 = inlined_call_operand.vmem [shape: f32[2,32], index: 8, kind: input, shape index: {}]
  %s9 = inlined_call_operand.vmem [shape: f32[128,32], index: 9, kind: output, shape index: {0}]
  %s10 = inlined_call_operand.vmem [shape: f32[64,32], index: 10, kind: output, shape index: {1}]
  %s11 = inlined_call_operand.hbm [shape: f32[2,32], index: 11, kind: output, shape index: {2}]
  %12 = xla_tuple %s9, %s10, %s11
  %s13 = sld [smem:[#allocation0]]
  $region97: #{tpu_custom_call.1} parent=0
    _
  %s15 = ssub.s32 1, %s13
  %s16 = scalar_select 0, %s15, %s13
  $region1: #{tpu_custom_call.1} parent=0
    #allocation7 [shape = 'u8[1024]{0}', space=vmem, size = 0x400, scoped, tag = 'output window, operand 2, single buffered']
    #allocation8 [shape = 's32[2]{0}', space=sflag, size = 0x8, scoped, tag = 'scoped memory for tpu_custom_call.1']
    %17 = vsyncpa [#allocation8], 0
    loop: start=0, step=1, limit=4
    $region2: #{tpu_custom_call.1} parent=1 // loop_pre_header
      _
    $region3: #{tpu_custom_call.1} parent=1 // loop_header
      %s19 = sphi 0, %s23
      %p20 = scmp.ge.s32.totalorder %s19, 4
      %s29 = sphi 0, %s31
      %s32 = sphi 0, %s29
      %s33 = sphi 0, %s32
      %s49 = sphi 0, %s33
      %s53 = sphi 0, %s53
      %s55 = sphi 0, %s53
      %s56 = sphi 0, %s55
      %s70 = sphi 0, %s56
      %s76 = sphi 0, %s78
      %s79 = sphi 0, %s76
      %s80 = sphi 0, %s79
      %s96 = sphi 0, %s80
      %s100 = sphi 0, %s100
      %s102 = sphi 0, %s100
      %s103 = sphi 0, %s102
      %s117 = sphi 0, %s103
      %s121 = sphi 0, %s121
      %s123 = sphi 0, %s121
      %s124 = sphi 0, %s123
      %s138 = sphi 0, %s124
      %s142 = sphi 0, %s142
      %s144 = sphi 0, %s142
      %s145 = sphi 0, %s144
      %s159 = sphi 0, %s145
      %s163 = sphi 0, %s163
      %s165 = sphi 0, %s163
      %s166 = sphi 0, %s165
      %s180 = sphi 0, %s166
      %s184 = sphi 0, %s184
      %s186 = sphi 0, %s184
      %s187 = sphi 0, %s186
      %s201 = sphi 0, %s187
      %s205 = sphi 0, %s205
      %s207 = sphi 0, %s205
      %s208 = sphi 0, %s207
      %s222 = sphi 0, %s208
      %s226 = sphi 0, %s226
      %s228 = sphi 0, %s226
      %s229 = sphi 0, %s228
      %s243 = sphi 0, %s229
      %s249 = sphi 0, %s251
      %s252 = sphi 0, %s249
      %s253 = sphi 0, %s252
      %s269 = sphi 0, %s253
      %s273 = sphi 0, %s273
      %s275 = sphi 0, %s273
      %s276 = sphi 0, %s275
      %s290 = sphi 0, %s276
    $region4: #{tpu_custom_call.1} parent=1 // loop_header_branch
      %22 = sbr.rel (%p20) target = $region8
    $region5: #{tpu_custom_call.1} parent=1 // loop_body
      %s24 = ssub.s32 %s19, 1
      %s25 = ssub.s32 %s19, 2
      %s26 = sadd.s32 %s19, 1
      %s27 = ssub.s32 %s19, %s26
      %p28 = scmp.eq.s32.totalorder %s27, 0
      %s30 = sadd.s32 %s29, 1
      %s31 = scalar_select %p28, %s29, %s30
      %p34 = pneg %p28
      %p35 = scmp.eq.s32.totalorder %s19, 1
      %p36 = por %p34, %p35
      %p37 = scmp.ne.s32.totalorder %s29, %s32
      %p38 = scmp.eq.s32.totalorder %s19, 0
      %p39 = por %p37, %p38
      %p40 = scmp.ne.s32.totalorder %s29, %s32
      %p41 = scmp.eq.s32.totalorder %s24, 1
      %p42 = por %p40, %p41
      %p43 = scmp.ne.s32.totalorder %s32, %s33
      %p44 = scmp.eq.s32.totalorder %s24, 0
      %p45 = por %p43, %p44
      %p46 = scmp.ne.s32.totalorder %s32, %s33
      %p47 = scmp.eq.s32.totalorder %s25, 1
      %p48 = por %p46, %p47
      %p50 = scmp.ne.s32.totalorder %s33, %s49
      %p51 = scmp.eq.s32.totalorder %s25, 0
      %p52 = por %p50, %p51
      %s54 = sadd.s32 %s53, 1
      %p57 = scmp.eq.s32.totalorder %s19, 1
      %p58 = scmp.ne.s32.totalorder %s53, %s55
      %p59 = scmp.eq.s32.totalorder %s19, 0
      %p60 = por %p58, %p59
      %p61 = scmp.ne.s32.totalorder %s53, %s55
      %p62 = scmp.eq.s32.totalorder %s24, 1
      %p63 = por %p61, %p62
      %p64 = scmp.ne.s32.totalorder %s55, %s56
      %p65 = scmp.eq.s32.totalorder %s24, 0
      %p66 = por %p64, %p65
      %p67 = scmp.ne.s32.totalorder %s55, %s56
      %p68 = scmp.eq.s32.totalorder %s25, 1
      %p69 = por %p67, %p68
      %p71 = scmp.ne.s32.totalorder %s56, %s70
      %p72 = scmp.eq.s32.totalorder %s25, 0
      %p73 = por %p71, %p72
      %s74 = ssub.s32 %s19, %s26
      %p75 = scmp.eq.s32.totalorder %s74, 0
      %s77 = sadd.s32 %s76, 1
      %s78 = scalar_select %p75, %s76, %s77
      %p81 = pneg %p75
      %p82 = scmp.eq.s32.totalorder %s19, 1
      %p83 = por %p81, %p82
      %p84 = scmp.ne.s32.totalorder %s76, %s79
      %p85 = scmp.eq.s32.totalorder %s19, 0
      %p86 = por %p84, %p85
      %p87 = scmp.ne.s32.totalorder %s76, %s79
      %p88 = scmp.eq.s32.totalorder %s24, 1
      %p89 = por %p87, %p88
      %p90 = scmp.ne.s32.totalorder %s79, %s80
      %p91 = scmp.eq.s32.totalorder %s24, 0
      %p92 = por %p90, %p91
      %p93 = scmp.ne.s32.totalorder %s79, %s80
      %p94 = scmp.eq.s32.totalorder %s25, 1
      %p95 = por %p93, %p94
      %p97 = scmp.ne.s32.totalorder %s80, %s96
      %p98 = scmp.eq.s32.totalorder %s25, 0
      %p99 = por %p97, %p98
      %s101 = sadd.s32 %s100, 1
      %p104 = scmp.eq.s32.totalorder %s19, 1
      %p105 = scmp.ne.s32.totalorder %s100, %s102
      %p106 = scmp.eq.s32.totalorder %s19, 0
      %p107 = por %p105, %p106
      %p108 = scmp.ne.s32.totalorder %s100, %s102
      %p109 = scmp.eq.s32.totalorder %s24, 1
      %p110 = por %p108, %p109
      %p111 = scmp.ne.s32.totalorder %s102, %s103
      %p112 = scmp.eq.s32.totalorder %s24, 0
      %p113 = por %p111, %p112
      %p114 = scmp.ne.s32.totalorder %s102, %s103
      %p115 = scmp.eq.s32.totalorder %s25, 1
      %p116 = por %p114, %p115
      %p118 = scmp.ne.s32.totalorder %s103, %s117
      %p119 = scmp.eq.s32.totalorder %s25, 0
      %p120 = por %p118, %p119
      %s122 = sadd.s32 %s121, 1
      %p125 = scmp.eq.s32.totalorder %s19, 1
      %p126 = scmp.ne.s32.totalorder %s121, %s123
      %p127 = scmp.eq.s32.totalorder %s19, 0
      %p128 = por %p126, %p127
      %p129 = scmp.ne.s32.totalorder %s121, %s123
      %p130 = scmp.eq.s32.totalorder %s24, 1
      %p131 = por %p129, %p130
      %p132 = scmp.ne.s32.totalorder %s123, %s124
      %p133 = scmp.eq.s32.totalorder %s24, 0
      %p134 = por %p132, %p133
      %p135 = scmp.ne.s32.totalorder %s123, %s124
      %p136 = scmp.eq.s32.totalorder %s25, 1
      %p137 = por %p135, %p136
      %p139 = scmp.ne.s32.totalorder %s124, %s138
      %p140 = scmp.eq.s32.totalorder %s25, 0
      %p141 = por %p139, %p140
      %s143 = sadd.s32 %s142, 1
      %p146 = scmp.eq.s32.totalorder %s19, 1
      %p147 = scmp.ne.s32.totalorder %s142, %s144
      %p148 = scmp.eq.s32.totalorder %s19, 0
      %p149 = por %p147, %p148
      %p150 = scmp.ne.s32.totalorder %s142, %s144
      %p151 = scmp.eq.s32.totalorder %s24, 1
      %p152 = por %p150, %p151
      %p153 = scmp.ne.s32.totalorder %s144, %s145
      %p154 = scmp.eq.s32.totalorder %s24, 0
      %p155 = por %p153, %p154
      %p156 = scmp.ne.s32.totalorder %s144, %s145
      %p157 = scmp.eq.s32.totalorder %s25, 1
      %p158 = por %p156, %p157
      %p160 = scmp.ne.s32.totalorder %s145, %s159
      %p161 = scmp.eq.s32.totalorder %s25, 0
      %p162 = por %p160, %p161
      %s164 = sadd.s32 %s163, 1
      %p167 = scmp.eq.s32.totalorder %s19, 1
      %p168 = scmp.ne.s32.totalorder %s163, %s165
      %p169 = scmp.eq.s32.totalorder %s19, 0
      %p170 = por %p168, %p169
      %p171 = scmp.ne.s32.totalorder %s163, %s165
      %p172 = scmp.eq.s32.totalorder %s24, 1
      %p173 = por %p171, %p172
      %p174 = scmp.ne.s32.totalorder %s165, %s166
      %p175 = scmp.eq.s32.totalorder %s24, 0
      %p176 = por %p174, %p175
      %p177 = scmp.ne.s32.totalorder %s165, %s166
      %p178 = scmp.eq.s32.totalorder %s25, 1
      %p179 = por %p177, %p178
      %p181 = scmp.ne.s32.totalorder %s166, %s180
      %p182 = scmp.eq.s32.totalorder %s25, 0
      %p183 = por %p181, %p182
      %s185 = sadd.s32 %s184, 1
      %p188 = scmp.eq.s32.totalorder %s19, 1
      %p189 = scmp.ne.s32.totalorder %s184, %s186
      %p190 = scmp.eq.s32.totalorder %s19, 0
      %p191 = por %p189, %p190
      %p192 = scmp.ne.s32.totalorder %s184, %s186
      %p193 = scmp.eq.s32.totalorder %s24, 1
      %p194 = por %p192, %p193
      %p195 = scmp.ne.s32.totalorder %s186, %s187
      %p196 = scmp.eq.s32.totalorder %s24, 0
      %p197 = por %p195, %p196
      %p198 = scmp.ne.s32.totalorder %s186, %s187
      %p199 = scmp.eq.s32.totalorder %s25, 1
      %p200 = por %p198, %p199
      %p202 = scmp.ne.s32.totalorder %s187, %s201
      %p203 = scmp.eq.s32.totalorder %s25, 0
      %p204 = por %p202, %p203
      %s206 = sadd.s32 %s205, 1
      %p209 = scmp.eq.s32.totalorder %s19, 1
      %p210 = scmp.ne.s32.totalorder %s205, %s207
      %p211 = scmp.eq.s32.totalorder %s19, 0
      %p212 = por %p210, %p211
      %p213 = scmp.ne.s32.totalorder %s205, %s207
      %p214 = scmp.eq.s32.totalorder %s24, 1
      %p215 = por %p213, %p214
      %p216 = scmp.ne.s32.totalorder %s207, %s208
      %p217 = scmp.eq.s32.totalorder %s24, 0
      %p218 = por %p216, %p217
      %p219 = scmp.ne.s32.totalorder %s207, %s208
      %p220 = scmp.eq.s32.totalorder %s25, 1
      %p221 = por %p219, %p220
      %p223 = scmp.ne.s32.totalorder %s208, %s222
      %p224 = scmp.eq.s32.totalorder %s25, 0
      %p225 = por %p223, %p224
      %s227 = sadd.s32 %s226, 1
      %p230 = scmp.eq.s32.totalorder %s19, 1
      %p231 = scmp.ne.s32.totalorder %s226, %s228
      %p232 = scmp.eq.s32.totalorder %s19, 0
      %p233 = por %p231, %p232
      %p234 = scmp.ne.s32.totalorder %s226, %s228
      %p235 = scmp.eq.s32.totalorder %s24, 1
      %p236 = por %p234, %p235
      %p237 = scmp.ne.s32.totalorder %s228, %s229
      %p238 = scmp.eq.s32.totalorder %s24, 0
      %p239 = por %p237, %p238
      %p240 = scmp.ne.s32.totalorder %s228, %s229
      %p241 = scmp.eq.s32.totalorder %s25, 1
      %p242 = por %p240, %p241
      %p244 = scmp.ne.s32.totalorder %s229, %s243
      %p245 = scmp.eq.s32.totalorder %s25, 0
      %p246 = por %p244, %p245
      %s247 = ssub.s32 %s19, %s26
      %p248 = scmp.eq.s32.totalorder %s247, 0
      %s250 = sadd.s32 %s249, 1
      %s251 = scalar_select %p248, %s249, %s250
      %p254 = pneg %p248
      %p255 = scmp.eq.s32.totalorder %s19, 1
      %p256 = por %p254, %p255
      %p257 = scmp.ne.s32.totalorder %s249, %s252
      %p258 = scmp.eq.s32.totalorder %s19, 0
      %p259 = por %p257, %p258
      %p260 = scmp.ne.s32.totalorder %s249, %s252
      %p261 = scmp.eq.s32.totalorder %s24, 1
      %p262 = por %p260, %p261
      %p263 = scmp.ne.s32.totalorder %s252, %s253
      %p264 = scmp.eq.s32.totalorder %s24, 0
      %p265 = por %p263, %p264
      %p266 = scmp.ne.s32.totalorder %s252, %s253
      %p267 = scmp.eq.s32.totalorder %s25, 1
      %p268 = por %p266, %p267
      %p270 = scmp.ne.s32.totalorder %s253, %s269
      %p271 = scmp.eq.s32.totalorder %s25, 0
      %p272 = por %p270, %p271
      %s274 = sadd.s32 %s273, 1
      %p277 = scmp.eq.s32.totalorder %s19, 1
      %p278 = scmp.ne.s32.totalorder %s273, %s275
      %p279 = scmp.eq.s32.totalorder %s19, 0
      %p280 = por %p278, %p279
      %p281 = scmp.ne.s32.totalorder %s273, %s275
      %p282 = scmp.eq.s32.totalorder %s24, 1
      %p283 = por %p281, %p282
      %p284 = scmp.ne.s32.totalorder %s275, %s276
      %p285 = scmp.eq.s32.totalorder %s24, 0
      %p286 = por %p284, %p285
      %p287 = scmp.ne.s32.totalorder %s275, %s276
      %p288 = scmp.eq.s32.totalorder %s25, 1
      %p289 = por %p287, %p288
      %p291 = scmp.ne.s32.totalorder %s276, %s290
      %p292 = scmp.eq.s32.totalorder %s25, 0
      %p293 = por %p291, %p292
      %p294 = scmp.le.s32.totalorder 1, %s19
      %p295 = scmp.lt.s32.totalorder %s19, 3
      %p296 = pnand %p294, %p295
      %p297 = pneg %p296
      // Predicated region
      $region9: #{tpu_custom_call.1} parent=5 // pred_check
        _
      $region10: #{tpu_custom_call.1} parent=5 // pred_check_branch
        %299 = sbr.rel (%p296) target = $region12
      $region11: #{tpu_custom_call.1} parent=5 // pred_region
        %s300 = ssub.s32 %s19, 1
        // Predicated region
        $region13: #{tpu_custom_call.1} parent=11 // pred_check
          %p301 = pneg %p66
        $region14: #{tpu_custom_call.1} parent=11 // pred_check_branch
          %303 = sbr.rel (%p301) target = $region16
        $region15: #{tpu_custom_call.1} parent=11 // pred_region
          _
        $region16: #{tpu_custom_call.1} parent=11 // pred_fallthru
          _
        // Predicated region
        $region17: #{tpu_custom_call.1} parent=11 // pred_check
          %p304 = pneg %p113
        $region18: #{tpu_custom_call.1} parent=11 // pred_check_branch
          %306 = sbr.rel (%p304) target = $region20
        $region19: #{tpu_custom_call.1} parent=11 // pred_region
          _
        $region20: #{tpu_custom_call.1} parent=11 // pred_fallthru
          _
        // Predicated region
        $region21: #{tpu_custom_call.1} parent=11 // pred_check
          %p307 = pneg %p134
        $region22: #{tpu_custom_call.1} parent=11 // pred_check_branch
          %309 = sbr.rel (%p307) target = $region24
        $region23: #{tpu_custom_call.1} parent=11 // pred_region
          _
        $region24: #{tpu_custom_call.1} parent=11 // pred_fallthru
          _
        // Predicated region
        $region25: #{tpu_custom_call.1} parent=11 // pred_check
          %p310 = pneg %p155
        $region26: #{tpu_custom_call.1} parent=11 // pred_check_branch
          %312 = sbr.rel (%p310) target = $region28
        $region27: #{tpu_custom_call.1} parent=11 // pred_region
          _
        $region28: #{tpu_custom_call.1} parent=11 // pred_fallthru
          _
        // Predicated region
        $region29: #{tpu_custom_call.1} parent=11 // pred_check
          %p313 = pneg %p176
        $region30: #{tpu_custom_call.1} parent=11 // pred_check_branch
          %315 = sbr.rel (%p313) target = $region32
        $region31: #{tpu_custom_call.1} parent=11 // pred_region
          _
        $region32: #{tpu_custom_call.1} parent=11 // pred_fallthru
          _
        // Predicated region
        $region33: #{tpu_custom_call.1} parent=11 // pred_check
          %p316 = pneg %p197
        $region34: #{tpu_custom_call.1} parent=11 // pred_check_branch
          %318 = sbr.rel (%p316) target = $region36
        $region35: #{tpu_custom_call.1} parent=11 // pred_region
          _
        $region36: #{tpu_custom_call.1} parent=11 // pred_fallthru
          _
        // Predicated region
        $region37: #{tpu_custom_call.1} parent=11 // pred_check
          %p319 = pneg %p218
        $region38: #{tpu_custom_call.1} parent=11 // pred_check_branch
          %321 = sbr.rel (%p319) target = $region40
        $region39: #{tpu_custom_call.1} parent=11 // pred_region
          _
        $region40: #{tpu_custom_call.1} parent=11 // pred_fallthru
          _
      $region12: #{tpu_custom_call.1} parent=5 // pred_fallthru
        _
      %p322 = scmp.lt.s32.totalorder %s19, 2
      // Predicated region
      $region41: #{tpu_custom_call.1} parent=5 // pred_check
        %p323 = pneg %p322
      $region42: #{tpu_custom_call.1} parent=5 // pred_check_branch
        %325 = sbr.rel (%p323) target = $region44
      $region43: #{tpu_custom_call.1} parent=5 // pred_region
        // Predicated region
        $region45: #{tpu_custom_call.1} parent=43 // pred_check
          %p326 = pneg %p39
        $region46: #{tpu_custom_call.1} parent=43 // pred_check_branch
          %328 = sbr.rel (%p326) target = $region48
        $region47: #{tpu_custom_call.1} parent=43 // pred_region
          %p329 = scmp.lt.s32.totalorder %s19, 1
          %s330 = scalar_select %p329, %s19, 1
          %s331 = smul.addr %s330, 4
          %s332 = smul.addr %s331, 8
          %s333 = scalar_lea.vmem %s0, %s332
        $region48: #{tpu_custom_call.1} parent=43 // pred_fallthru
          _
        // Predicated region
        $region49: #{tpu_custom_call.1} parent=43 // pred_check
          %p334 = pneg %p86
        $region50: #{tpu_custom_call.1} parent=43 // pred_check_branch
          %336 = sbr.rel (%p334) target = $region52
        $region51: #{tpu_custom_call.1} parent=43 // pred_region
          %s337 = smul.u32 4, %s19
          %p338 = scmp.lt.s32.totalorder %s337, 7
          %s339 = scalar_select %p338, %s337, 7
          %s340 = smul.addr %s339, 8
          %s341 = scalar_lea.vmem %s2, %s340
          %s342 = smul.u32 4, %s19
        $region52: #{tpu_custom_call.1} parent=43 // pred_fallthru
          _
      $region44: #{tpu_custom_call.1} parent=5 // pred_fallthru
        _
      %p343 = scmp.le.s32.totalorder 1, %s19
      %p344 = scmp.lt.s32.totalorder %s19, 3
      %p345 = pnand %p343, %p344
      %p346 = pneg %p345
      // Predicated region
      $region53: #{tpu_custom_call.1} parent=5 // pred_check
        _
      $region54: #{tpu_custom_call.1} parent=5 // pred_check_branch
        %348 = sbr.rel (%p345) target = $region56
      $region55: #{tpu_custom_call.1} parent=5 // pred_region
        %s349 = ssub.s32 %s19, 1
        %p350 = scmp.lt.s32.totalorder %s24, 1
        %s351 = scalar_select %p350, %s24, 1
        %s352 = smul.addr %s351, 4
        %s353 = smul.addr %s352, 8
        %s354 = scalar_lea.vmem %s0, %s353
        %p355 = pneg %p45
        %p356 = pneg %p42
        %p357 = pneg %p66
        %p358 = pneg %p63
        %s359 = smul.u32 4, %s24
        %p360 = scmp.lt.s32.totalorder %s359, 7
        %s361 = scalar_select %p360, %s359, 7
        %s362 = smul.addr %s361, 8
        %s363 = scalar_lea.vmem %s2, %s362
        %p364 = pneg %p92
        %p365 = pneg %p89
        %p366 = pneg %p113
        %p367 = pneg %p110
        %p368 = pneg %p134
        %p369 = pneg %p131
        %p370 = pneg %p155
        %p371 = pneg %p152
        %p372 = pneg %p176
        %p373 = pneg %p173
        %p374 = pneg %p197
        %p375 = pneg %p194
        %p376 = pneg %p218
        %p377 = pneg %p215
        %p378 = pneg %p239
        %p379 = pneg %p236
        %p380 = pneg %p265
        %p381 = pneg %p262
        %s382 = smul.u32 4, %s24
        %p383 = scmp.lt.s32.totalorder %s382, 7
        %s384 = scalar_select %p383, %s382, 7
        %s385 = smul.addr %s384, 8
        %s386 = scalar_lea.vmem %s10, %s385
        %p387 = pneg %p286
        %p388 = pneg %p283
        %p389 = scmp.lt.s32.totalorder %s24, 1
        %s390 = scalar_select %p389, %s24, 1
        %s391 = smul.addr %s390, 4
        %s392 = smul.addr %s391, 8
        %s393 = scalar_lea.vmem %s0, %s392
        %s394 = smul.u32 4, %s24
        %p395 = scmp.lt.s32.totalorder %s394, 7
        %s396 = scalar_select %p395, %s394, 7
        %s397 = smul.addr %s396, 8
        %s398 = scalar_lea.vmem %s2, %s397
        %s399 = smul.u32 4, %s24
        %s400 = smul.u32 4, %s24
        %p401 = scmp.lt.s32.totalorder %s400, 7
        %s402 = scalar_select %p401, %s400, 7
        %s403 = smul.addr %s402, 8
        %s404 = scalar_lea.vmem %s10, %s403
        %s405 = smul.u32 4, %s24
        %p406 = scmp.eq.s32.totalorder %s24, 0
        // Predicated region
        $region57: #{tpu_custom_call.1} parent=55 // pred_check
          %p407 = pneg %p406
        $region58: #{tpu_custom_call.1} parent=55 // pred_check_branch
          %409 = sbr.rel (%p407) target = $region60
        $region59: #{tpu_custom_call.1} parent=55 // pred_region
          %vm410 = vcmask 523264
          %411 = vst.msk [vmem:[#allocation3] sm:$0xff] %vm410, 0.0
          %412 = vst.msk [vmem:[#allocation3 + $0x8] sm:$0xff] %vm410, 0.0
          %413 = vst.msk [vmem:[#allocation3 + $0x10] sm:$0xff] %vm410, 0.0
          %414 = vst.msk [vmem:[#allocation3 + $0x18] sm:$0xff] %vm410, 0.0
          %415 = vst.msk [vmem:[#allocation3 + $0x20] sm:$0xff] %vm410, 0.0
          %416 = vst.msk [vmem:[#allocation3 + $0x28] sm:$0xff] %vm410, 0.0
          %417 = vst.msk [vmem:[#allocation3 + $0x30] sm:$0xff] %vm410, 0.0
          %418 = vst.msk [vmem:[#allocation3 + $0x38] sm:$0xff] %vm410, 0.0
          %419 = vst.msk [vmem:[#allocation3 + $0x40] sm:$0xff] %vm410, 0.0
          %420 = vst.msk [vmem:[#allocation3 + $0x48] sm:$0xff] %vm410, 0.0
          %421 = vst.msk [vmem:[#allocation3 + $0x50] sm:$0xff] %vm410, 0.0
          %422 = vst.msk [vmem:[#allocation3 + $0x58] sm:$0xff] %vm410, 0.0
          %423 = vst.msk [vmem:[#allocation3 + $0x60] sm:$0xff] %vm410, 0.0
          %424 = vst.msk [vmem:[#allocation3 + $0x68] sm:$0xff] %vm410, 0.0
          %425 = vst.msk [vmem:[#allocation3 + $0x70] sm:$0xff] %vm410, 0.0
          %426 = vst.msk [vmem:[#allocation3 + $0x78] sm:$0xff] %vm410, 0.0
          %vm427 = vcmask 253952
          %428 = vst.msk [vmem:[#allocation5] sm:$0x1] %vm427, 0.0
          %429 = vst.msk [vmem:[#allocation6] sm:$0x1] %vm427, 0.0
          %v430 = vld [vmem:[%s1] sm:$0xff]
          %v431 = vld [vmem:[%s1 + $0x8] sm:$0xff]
          %v432 = vld [vmem:[%s1 + $0x10] sm:$0xff]
          %v433 = vld [vmem:[%s1 + $0x18] sm:$0xff]
          %v434 = vld [vmem:[%s1 + $0x20] sm:$0xff]
          %v435 = vld [vmem:[%s1 + $0x28] sm:$0xff]
          %v436 = vld [vmem:[%s1 + $0x30] sm:$0xff]
          %v437 = vld [vmem:[%s1 + $0x38] sm:$0xff]
          %v438 = vld [vmem:[%s1 + $0x40] sm:$0xff]
          %v439 = vld [vmem:[%s1 + $0x48] sm:$0xff]
          %v440 = vld [vmem:[%s1 + $0x50] sm:$0xff]
          %v441 = vld [vmem:[%s1 + $0x58] sm:$0xff]
          %v442 = vld [vmem:[%s1 + $0x60] sm:$0xff]
          %v443 = vld [vmem:[%s1 + $0x68] sm:$0xff]
          %v444 = vld [vmem:[%s1 + $0x70] sm:$0xff]
          %v445 = vld [vmem:[%s1 + $0x78] sm:$0xff]
          %v446 = vld [vmem:[%s3] sm:$0xff]
          %v447 = vld [vmem:[%s3 + $0x8] sm:$0xff]
          %v448 = vld [vmem:[%s3 + $0x10] sm:$0xff]
          %v449 = vld [vmem:[%s3 + $0x18] sm:$0xff]
          %v450 = vld [vmem:[%s4] sm:$0x1]
          %v452 = vperm.slane %v450, 0
          %vm454 = vcmask 261120
          %v456 = vsel %vm454, %v430, 0
          %v459 = vsel %vm454, %v431, 0
          %v462 = vsel %vm454, %v432, 0
          %v465 = vsel %vm454, %v433, 0
          %v468 = vsel %vm454, %v434, 0
          %v471 = vsel %vm454, %v435, 0
          %v474 = vsel %vm454, %v436, 0
          %v477 = vsel %vm454, %v437, 0
          %v480 = vsel %vm454, %v438, 0
          %v483 = vsel %vm454, %v439, 0
          %v486 = vsel %vm454, %v440, 0
          %v489 = vsel %vm454, %v441, 0
          %v492 = vsel %vm454, %v442, 0
          %v495 = vsel %vm454, %v443, 0
          %v498 = vsel %vm454, %v444, 0
          %v501 = vsel %vm454, %v445, 0
          %503 = vmatpush.msra.mxu0 0.0
          %504 = vmatpush.msra.mxu0 0.0
          %505 = vmatpush.msra.mxu0 0.0
          %506 = vmatpush.msra.mxu0 0.0
          %507 = vmatpush.msra.mxu0 0.0
          %508 = vmatpush.msra.mxu0 0.0
          %509 = vmatpush.msra.mxu0 0.0
          %510 = vmatpush.msra.mxu0 0.0
          %511 = vmatpush.msra.mxu0 0.0
          %512 = vmatpush.msra.mxu0 0.0
          %513 = vmatpush.msra.mxu0 0.0
          %514 = vmatpush.msra.mxu0 0.0
          %515 = vmatpush.msra.mxu0 %v449
          %516 = vmatpush.msra.mxu0 %v448
          %517 = vmatpush.msra.mxu0 %v447
          %518 = vmatpush.msra.mxu0 %v446
          %519 = vmatmul.f32.gmra.mxu0 %v456
          %v520 = vpop.f32.mrf.mxu0
          %v521 = vadd.f32 %v452, %v520
          %522 = vmatmul.f32.gmra.mxu0 %v459
          %v523 = vpop.f32.mrf.mxu0
          %v524 = vadd.f32 %v452, %v523
          %525 = vmatmul.f32.gmra.mxu0 %v462
          %v526 = vpop.f32.mrf.mxu0
          %v527 = vadd.f32 %v452, %v526
          %528 = vmatmul.f32.gmra.mxu0 %v465
          %v529 = vpop.f32.mrf.mxu0
          %v530 = vadd.f32 %v452, %v529
          %531 = vmatmul.f32.gmra.mxu0 %v468
          %v532 = vpop.f32.mrf.mxu0
          %v533 = vadd.f32 %v452, %v532
          %534 = vmatmul.f32.gmra.mxu0 %v471
          %v535 = vpop.f32.mrf.mxu0
          %v536 = vadd.f32 %v452, %v535
          %537 = vmatmul.f32.gmra.mxu0 %v474
          %v538 = vpop.f32.mrf.mxu0
          %v539 = vadd.f32 %v452, %v538
          %540 = vmatmul.f32.gmra.mxu0 %v477
          %v541 = vpop.f32.mrf.mxu0
          %v542 = vadd.f32 %v452, %v541
          %543 = vmatmul.f32.gmra.mxu0 %v480
          %v544 = vpop.f32.mrf.mxu0
          %v545 = vadd.f32 %v452, %v544
          %546 = vmatmul.f32.gmra.mxu0 %v483
          %v547 = vpop.f32.mrf.mxu0
          %v548 = vadd.f32 %v452, %v547
          %549 = vmatmul.f32.gmra.mxu0 %v486
          %v550 = vpop.f32.mrf.mxu0
          %v551 = vadd.f32 %v452, %v550
          %552 = vmatmul.f32.gmra.mxu0 %v489
          %v553 = vpop.f32.mrf.mxu0
          %v554 = vadd.f32 %v452, %v553
          %555 = vmatmul.f32.gmra.mxu0 %v492
          %v556 = vpop.f32.mrf.mxu0
          %v557 = vadd.f32 %v452, %v556
          %558 = vmatmul.f32.gmra.mxu0 %v495
          %v559 = vpop.f32.mrf.mxu0
          %v560 = vadd.f32 %v452, %v559
          %561 = vmatmul.f32.gmra.mxu0 %v498
          %v562 = vpop.f32.mrf.mxu0
          %v563 = vadd.f32 %v452, %v562
          %564 = vmatmul.f32.gmra.mxu0 %v501
          %v565 = vpop.f32.mrf.mxu0
          %v566 = vadd.f32 %v452, %v565
          %567 = vdwg.mxu0
          %568 = vst [vmem:[#allocation2] sm:$0xff] %v521
          %569 = vst [vmem:[#allocation2 + $0x8] sm:$0xff] %v524
          %570 = vst [vmem:[#allocation2 + $0x10] sm:$0xff] %v527
          %571 = vst [vmem:[#allocation2 + $0x18] sm:$0xff] %v530
          %572 = vst [vmem:[#allocation2 + $0x20] sm:$0xff] %v533
          %573 = vst [vmem:[#allocation2 + $0x28] sm:$0xff] %v536
          %574 = vst [vmem:[#allocation2 + $0x30] sm:$0xff] %v539
          %575 = vst [vmem:[#allocation2 + $0x38] sm:$0xff] %v542
          %576 = vst [vmem:[#allocation2 + $0x40] sm:$0xff] %v545
          %577 = vst [vmem:[#allocation2 + $0x48] sm:$0xff] %v548
          %578 = vst [vmem:[#allocation2 + $0x50] sm:$0xff] %v551
          %579 = vst [vmem:[#allocation2 + $0x58] sm:$0xff] %v554
          %580 = vst [vmem:[#allocation2 + $0x60] sm:$0xff] %v557
          %581 = vst [vmem:[#allocation2 + $0x68] sm:$0xff] %v560
          %582 = vst [vmem:[#allocation2 + $0x70] sm:$0xff] %v563
          %583 = vst [vmem:[#allocation2 + $0x78] sm:$0xff] %v566
        $region60: #{tpu_custom_call.1} parent=55 // pred_fallthru
          _
        %v584 = vld [vmem:[#allocation2] sm:$0xff]
        %v585 = vld [vmem:[#allocation2 + $0x8] sm:$0xff]
        %v586 = vld [vmem:[#allocation2 + $0x10] sm:$0xff]
        %v587 = vld [vmem:[#allocation2 + $0x18] sm:$0xff]
        %v588 = vld [vmem:[#allocation2 + $0x20] sm:$0xff]
        %v589 = vld [vmem:[#allocation2 + $0x28] sm:$0xff]
        %v590 = vld [vmem:[#allocation2 + $0x30] sm:$0xff]
        %v591 = vld [vmem:[#allocation2 + $0x38] sm:$0xff]
        %v592 = vld [vmem:[#allocation2 + $0x40] sm:$0xff]
        %v593 = vld [vmem:[#allocation2 + $0x48] sm:$0xff]
        %v594 = vld [vmem:[#allocation2 + $0x50] sm:$0xff]
        %v595 = vld [vmem:[#allocation2 + $0x58] sm:$0xff]
        %v596 = vld [vmem:[#allocation2 + $0x60] sm:$0xff]
        %v597 = vld [vmem:[#allocation2 + $0x68] sm:$0xff]
        %v598 = vld [vmem:[#allocation2 + $0x70] sm:$0xff]
        %v599 = vld [vmem:[#allocation2 + $0x78] sm:$0xff]
        %v600 = vld [vmem:[%s393] sm:$0xff]
        %v601 = vld [vmem:[%s393 + $0x8] sm:$0xff]
        %v602 = vlaneseq
        %v603 = vand.u32 %v602, 127
        %604 = vset.pattern.permute.xlu0 0
        %605 = vperm.xlu0 %604, %v600
        %v606 = vpop.permute.xlu0 %605
        %607 = vset.pattern.permute.xlu0 0
        %608 = vperm.xlu0 %607, %v601
        %v609 = vpop.permute.xlu0 %608
        %vm610 = vcmp.eq.s32.totalorder %v603, %v606
        %vm611 = vcmp.eq.s32.totalorder %v603, %v609
        %v612 = vsel %vm610, 1.0, 0.0
        %v613 = vsel %vm611, 1.0, 0.0
        %614 = vset.pattern.permute.xlu0 1
        %615 = vperm.xlu0 %614, %v600
        %v616 = vpop.permute.xlu0 %615
        %617 = vset.pattern.permute.xlu0 1
        %618 = vperm.xlu0 %617, %v601
        %v619 = vpop.permute.xlu0 %618
        %vm620 = vcmp.eq.s32.totalorder %v603, %v616
        %vm621 = vcmp.eq.s32.totalorder %v603, %v619
        %v622 = vsel %vm620, 1.0, 0.0
        %v623 = vsel %vm621, 1.0, 0.0
        %624 = vmatpush.msra.mxu0 %v599
        %625 = vmatpush.msra.mxu0 %v598
        %626 = vmatpush.msra.mxu0 %v597
        %627 = vmatpush.msra.mxu0 %v596
        %628 = vmatpush.msra.mxu0 %v595
        %629 = vmatpush.msra.mxu0 %v594
        %630 = vmatpush.msra.mxu0 %v593
        %631 = vmatpush.msra.mxu0 %v592
        %632 = vmatpush.msra.mxu0 %v591
        %633 = vmatpush.msra.mxu0 %v590
        %634 = vmatpush.msra.mxu0 %v589
        %635 = vmatpush.msra.mxu0 %v588
        %636 = vmatpush.msra.mxu0 %v587
        %637 = vmatpush.msra.mxu0 %v586
        %638 = vmatpush.msra.mxu0 %v585
        %639 = vmatpush.msra.mxu0 %v584
        %640 = vmatmul.f32.gmra.mxu0 %v612
        %v641 = vpop.f32.mrf.mxu0
        %v642 = vadd.f32 0.0, %v641
        %643 = vmatmul.f32.gmra.mxu0 %v613
        %v644 = vpop.f32.mrf.mxu0
        %v645 = vadd.f32 0.0, %v644
        %646 = vdwg.mxu0
        %647 = vmatpush.msra.mxu0 %v599
        %648 = vmatpush.msra.mxu0 %v598
        %649 = vmatpush.msra.mxu0 %v597
        %650 = vmatpush.msra.mxu0 %v596
        %651 = vmatpush.msra.mxu0 %v595
        %652 = vmatpush.msra.mxu0 %v594
        %653 = vmatpush.msra.mxu0 %v593
        %654 = vmatpush.msra.mxu0 %v592
        %655 = vmatpush.msra.mxu0 %v591
        %656 = vmatpush.msra.mxu0 %v590
        %657 = vmatpush.msra.mxu0 %v589
        %658 = vmatpush.msra.mxu0 %v588
        %659 = vmatpush.msra.mxu0 %v587
        %660 = vmatpush.msra.mxu0 %v586
        %661 = vmatpush.msra.mxu0 %v585
        %662 = vmatpush.msra.mxu0 %v584
        %663 = vmatmul.f32.gmra.mxu0 %v622
        %v664 = vpop.f32.mrf.mxu0
        %v665 = vadd.f32 0.0, %v664
        %666 = vmatmul.f32.gmra.mxu0 %v623
        %v667 = vpop.f32.mrf.mxu0
        %v668 = vadd.f32 0.0, %v667
        %669 = vdwg.mxu0
        %v670 = vld [vmem:[%s398] sm:$0xff]
        %v671 = vld [vmem:[%s398 + $0x8] sm:$0xff]
        %v672 = vld [vmem:[%s5] sm:$0xff]
        %v673 = vld [vmem:[%s5 + $0x8] sm:$0xff]
        %v674 = vld [vmem:[%s5 + $0x10] sm:$0xff]
        %v675 = vld [vmem:[%s5 + $0x18] sm:$0xff]
        %v676 = vld [vmem:[%s6] sm:$0x1]
        %v678 = vperm.slane %v676, 0
        %vm680 = vcmask 261120
        %v682 = vsel %vm680, %v670, 0
        %v685 = vsel %vm680, %v671, 0
        %687 = vmatpush.msra.mxu0 0.0
        %688 = vmatpush.msra.mxu0 0.0
        %689 = vmatpush.msra.mxu0 0.0
        %690 = vmatpush.msra.mxu0 0.0
        %691 = vmatpush.msra.mxu0 0.0
        %692 = vmatpush.msra.mxu0 0.0
        %693 = vmatpush.msra.mxu0 0.0
        %694 = vmatpush.msra.mxu0 0.0
        %695 = vmatpush.msra.mxu0 0.0
        %696 = vmatpush.msra.mxu0 0.0
        %697 = vmatpush.msra.mxu0 0.0
        %698 = vmatpush.msra.mxu0 0.0
        %699 = vmatpush.msra.mxu0 %v675
        %700 = vmatpush.msra.mxu0 %v674
        %701 = vmatpush.msra.mxu0 %v673
        %702 = vmatpush.msra.mxu0 %v672
        %703 = vmatmul.f32.gmra.mxu0 %v682
        %v704 = vpop.f32.mrf.mxu0
        %v705 = vadd.f32 %v678, %v704
        %706 = vmatmul.f32.gmra.mxu0 %v685
        %v707 = vpop.f32.mrf.mxu0
        %v708 = vadd.f32 %v678, %v707
        %709 = vdwg.mxu0
        %712 = vrot.lane.b32.xlu0 %v642, 96
        %v713 = vpop.permute.xlu0 %712
        %714 = vrot.lane.b32.xlu0 %v645, 96
        %v715 = vpop.permute.xlu0 %714
        %v718 = vadd.f32 %v705, %v713
        %v719 = vadd.f32 %v708, %v715
        %722 = vrot.lane.b32.xlu0 %v665, 64
        %v723 = vpop.permute.xlu0 %722
        %724 = vrot.lane.b32.xlu0 %v668, 64
        %v725 = vpop.permute.xlu0 %724
        %v728 = vadd.f32 %v718, %v723
        %v729 = vadd.f32 %v719, %v725
        %730 = vst.msk [vmem:[%s404] sm:$0xff] %vm680, %v728
        %731 = vst.msk [vmem:[%s404 + $0x8] sm:$0xff] %vm680, %v729
        %v732 = vxor.u32 %v728, 2147483648
        %v733 = vxor.u32 %v729, 2147483648
        %v734 = vmul.f32 %v732, 1.442695
        %v735 = vpow.pop %v734
        %v736 = vmul.f32 %v733, 1.442695
        %v737 = vpow.pop %v736
        %v738 = vadd.f32 %v735, 1.0
        %v739 = vadd.f32 %v737, 1.0
        %v740 = vrcp.pop %v738
        %v741 = vmul.f32 %v738, %v740
        %v742 = vsub.f32 1.0, %v741
        %v743 = vmul.f32 %v740, %v742
        %v744 = vadd.f32 %v740, %v743
        %vm745 = vweird.f32 %v738
        %vm746 = vweird.f32 %v740
        %vm747 = vmor %vm745, %vm746
        %v748 = vsel %vm747, %v740, %v744
        %v749 = vand.u32 2147483647, %v738
        %vm750 = vcmp.eq.f32.partialorder %v749, 8.507059e+37
        %v751 = vand.u32 %v738, 2147483648
        %v752 = vor.u32 1.1754944e-38, %v751
        %v753 = vsel %vm750, %v752, %v748
        %v754 = vmul.f32 1.0, %v753
        %v755 = vrcp.pop %v739
        %v756 = vmul.f32 %v739, %v755
        %v757 = vsub.f32 1.0, %v756
        %v758 = vmul.f32 %v755, %v757
        %v759 = vadd.f32 %v755, %v758
        %vm760 = vweird.f32 %v739
        %vm761 = vweird.f32 %v755
        %vm762 = vmor %vm760, %vm761
        %v763 = vsel %vm762, %v755, %v759
        %v764 = vand.u32 2147483647, %v739
        %vm765 = vcmp.eq.f32.partialorder %v764, 8.507059e+37
        %v766 = vand.u32 %v739, 2147483648
        %v767 = vor.u32 1.1754944e-38, %v766
        %v768 = vsel %vm765, %v767, %v763
        %v769 = vmul.f32 1.0, %v768
        %v770 = vmul.f32 %v754, %v642
        %v771 = vmul.f32 %v769, %v645
        %774 = vrot.lane.b32.xlu0 %v754, 32
        %v775 = vpop.permute.xlu0 %774
        %776 = vrot.lane.b32.xlu0 %v769, 32
        %v777 = vpop.permute.xlu0 %776
        %v780 = vsel %vm680, %v770, %v775
        %v781 = vsel %vm680, %v771, %v777
        %v782 = vld [vmem:[#allocation3] sm:$0xff]
        %v783 = vld [vmem:[#allocation3 + $0x8] sm:$0xff]
        %v784 = vld [vmem:[#allocation3 + $0x10] sm:$0xff]
        %v785 = vld [vmem:[#allocation3 + $0x18] sm:$0xff]
        %v786 = vld [vmem:[#allocation3 + $0x20] sm:$0xff]
        %v787 = vld [vmem:[#allocation3 + $0x28] sm:$0xff]
        %v788 = vld [vmem:[#allocation3 + $0x30] sm:$0xff]
        %v789 = vld [vmem:[#allocation3 + $0x38] sm:$0xff]
        %v790 = vld [vmem:[#allocation3 + $0x40] sm:$0xff]
        %v791 = vld [vmem:[#allocation3 + $0x48] sm:$0xff]
        %v792 = vld [vmem:[#allocation3 + $0x50] sm:$0xff]
        %v793 = vld [vmem:[#allocation3 + $0x58] sm:$0xff]
        %v794 = vld [vmem:[#allocation3 + $0x60] sm:$0xff]
        %v795 = vld [vmem:[#allocation3 + $0x68] sm:$0xff]
        %v796 = vld [vmem:[#allocation3 + $0x70] sm:$0xff]
        %v797 = vld [vmem:[#allocation3 + $0x78] sm:$0xff]
        %798 = vxpose.xlu0.b32.start [1/16] %v622, 128
        %799 = vxpose.xlu0.b32.cont [2/16] %v623, 128
        %800 = vxpose.xlu0.b32.cont [3/16] 0.0, 128
        %801 = vxpose.xlu0.b32.cont [4/16] 0.0, 128
        %802 = vxpose.xlu0.b32.cont [5/16] 0.0, 128
        %803 = vxpose.xlu0.b32.cont [6/16] 0.0, 128
        %804 = vxpose.xlu0.b32.cont [7/16] 0.0, 128
        %805 = vxpose.xlu0.b32.cont [8/16] 0.0, 128
        %806 = vxpose.xlu0.b32.cont [9/16] 0.0, 128
        %807 = vxpose.xlu0.b32.cont [10/16] 0.0, 128
        %808 = vxpose.xlu0.b32.cont [11/16] 0.0, 128
        %809 = vxpose.xlu0.b32.cont [12/16] 0.0, 128
        %810 = vxpose.xlu0.b32.cont [13/16] 0.0, 128
        %811 = vxpose.xlu0.b32.cont [14/16] 0.0, 128
        %812 = vxpose.xlu0.b32.cont [15/16] 0.0, 128
        %813 = vxpose.xlu0.b32.end [16/16] 0.0, 128
        %v814 = vpop.trf.xlu0
        %v815 = vpop.trf.xlu0
        %v816 = vpop.trf.xlu0
        %v817 = vpop.trf.xlu0
        %v818 = vpop.trf.xlu0
        %v819 = vpop.trf.xlu0
        %v820 = vpop.trf.xlu0
        %v821 = vpop.trf.xlu0
        %v822 = vpop.trf.xlu0
        %v823 = vpop.trf.xlu0
        %v824 = vpop.trf.xlu0
        %v825 = vpop.trf.xlu0
        %v826 = vpop.trf.xlu0
        %v827 = vpop.trf.xlu0
        %v828 = vpop.trf.xlu0
        %v829 = vpop.trf.xlu0
        %vm830 = vcmask 130048
        %v832 = vsel %vm830, %v814, 0
        %v835 = vsel %vm830, %v815, 0
        %v838 = vsel %vm830, %v816, 0
        %v841 = vsel %vm830, %v817, 0
        %v844 = vsel %vm830, %v818, 0
        %v847 = vsel %vm830, %v819, 0
        %v850 = vsel %vm830, %v820, 0
        %v853 = vsel %vm830, %v821, 0
        %v856 = vsel %vm830, %v822, 0
        %v859 = vsel %vm830, %v823, 0
        %v862 = vsel %vm830, %v824, 0
        %v865 = vsel %vm830, %v825, 0
        %v868 = vsel %vm830, %v826, 0
        %v871 = vsel %vm830, %v827, 0
        %v874 = vsel %vm830, %v828, 0
        %v877 = vsel %vm830, %v829, 0
        %879 = vmatpush.msra.mxu0 0.0
        %880 = vmatpush.msra.mxu0 0.0
        %881 = vmatpush.msra.mxu0 0.0
        %882 = vmatpush.msra.mxu0 0.0
        %883 = vmatpush.msra.mxu0 0.0
        %884 = vmatpush.msra.mxu0 0.0
        %885 = vmatpush.msra.mxu0 0.0
        %886 = vmatpush.msra.mxu0 0.0
        %887 = vmatpush.msra.mxu0 0.0
        %888 = vmatpush.msra.mxu0 0.0
        %889 = vmatpush.msra.mxu0 0.0
        %890 = vmatpush.msra.mxu0 0.0
        %891 = vmatpush.msra.mxu0 0.0
        %892 = vmatpush.msra.mxu0 0.0
        %893 = vmatpush.msra.mxu0 %v781
        %894 = vmatpush.msra.mxu0 %v780
        %895 = vmatmul.f32.gmra.mxu0 %v832
        %v896 = vpop.f32.mrf.mxu0
        %v897 = vadd.f32 0.0, %v896
        %898 = vmatmul.f32.gmra.mxu0 %v835
        %v899 = vpop.f32.mrf.mxu0
        %v900 = vadd.f32 0.0, %v899
        %901 = vmatmul.f32.gmra.mxu0 %v838
        %v902 = vpop.f32.mrf.mxu0
        %v903 = vadd.f32 0.0, %v902
        %904 = vmatmul.f32.gmra.mxu0 %v841
        %v905 = vpop.f32.mrf.mxu0
        %v906 = vadd.f32 0.0, %v905
        %907 = vmatmul.f32.gmra.mxu0 %v844
        %v908 = vpop.f32.mrf.mxu0
        %v909 = vadd.f32 0.0, %v908
        %910 = vmatmul.f32.gmra.mxu0 %v847
        %v911 = vpop.f32.mrf.mxu0
        %v912 = vadd.f32 0.0, %v911
        %913 = vmatmul.f32.gmra.mxu0 %v850
        %v914 = vpop.f32.mrf.mxu0
        %v915 = vadd.f32 0.0, %v914
        %916 = vmatmul.f32.gmra.mxu0 %v853
        %v917 = vpop.f32.mrf.mxu0
        %v918 = vadd.f32 0.0, %v917
        %919 = vmatmul.f32.gmra.mxu0 %v856
        %v920 = vpop.f32.mrf.mxu0
        %v921 = vadd.f32 0.0, %v920
        %922 = vmatmul.f32.gmra.mxu0 %v859
        %v923 = vpop.f32.mrf.mxu0
        %v924 = vadd.f32 0.0, %v923
        %925 = vmatmul.f32.gmra.mxu0 %v862
        %v926 = vpop.f32.mrf.mxu0
        %v927 = vadd.f32 0.0, %v926
        %928 = vmatmul.f32.gmra.mxu0 %v865
        %v929 = vpop.f32.mrf.mxu0
        %v930 = vadd.f32 0.0, %v929
        %931 = vmatmul.f32.gmra.mxu0 %v868
        %v932 = vpop.f32.mrf.mxu0
        %v933 = vadd.f32 0.0, %v932
        %934 = vmatmul.f32.gmra.mxu0 %v871
        %v935 = vpop.f32.mrf.mxu0
        %v936 = vadd.f32 0.0, %v935
        %937 = vmatmul.f32.gmra.mxu0 %v874
        %v938 = vpop.f32.mrf.mxu0
        %v939 = vadd.f32 0.0, %v938
        %940 = vmatmul.f32.gmra.mxu0 %v877
        %v941 = vpop.f32.mrf.mxu0
        %v942 = vadd.f32 0.0, %v941
        %943 = vdwg.mxu0
        %v944 = vadd.f32 %v782, %v897
        %v945 = vadd.f32 %v783, %v900
        %v946 = vadd.f32 %v784, %v903
        %v947 = vadd.f32 %v785, %v906
        %v948 = vadd.f32 %v786, %v909
        %v949 = vadd.f32 %v787, %v912
        %v950 = vadd.f32 %v788, %v915
        %v951 = vadd.f32 %v789, %v918
        %v952 = vadd.f32 %v790, %v921
        %v953 = vadd.f32 %v791, %v924
        %v954 = vadd.f32 %v792, %v927
        %v955 = vadd.f32 %v793, %v930
        %v956 = vadd.f32 %v794, %v933
        %v957 = vadd.f32 %v795, %v936
        %v958 = vadd.f32 %v796, %v939
        %v959 = vadd.f32 %v797, %v942
        %vm960 = vcmask 523264
        %961 = vst.msk [vmem:[#allocation3] sm:$0xff] %vm960, %v944
        %962 = vst.msk [vmem:[#allocation3 + $0x8] sm:$0xff] %vm960, %v945
        %963 = vst.msk [vmem:[#allocation3 + $0x10] sm:$0xff] %vm960, %v946
        %964 = vst.msk [vmem:[#allocation3 + $0x18] sm:$0xff] %vm960, %v947
        %965 = vst.msk [vmem:[#allocation3 + $0x20] sm:$0xff] %vm960, %v948
        %966 = vst.msk [vmem:[#allocation3 + $0x28] sm:$0xff] %vm960, %v949
        %967 = vst.msk [vmem:[#allocation3 + $0x30] sm:$0xff] %vm960, %v950
        %968 = vst.msk [vmem:[#allocation3 + $0x38] sm:$0xff] %vm960, %v951
        %969 = vst.msk [vmem:[#allocation3 + $0x40] sm:$0xff] %vm960, %v952
        %970 = vst.msk [vmem:[#allocation3 + $0x48] sm:$0xff] %vm960, %v953
        %971 = vst.msk [vmem:[#allocation3 + $0x50] sm:$0xff] %vm960, %v954
        %972 = vst.msk [vmem:[#allocation3 + $0x58] sm:$0xff] %vm960, %v955
        %973 = vst.msk [vmem:[#allocation3 + $0x60] sm:$0xff] %vm960, %v956
        %974 = vst.msk [vmem:[#allocation3 + $0x68] sm:$0xff] %vm960, %v957
        %975 = vst.msk [vmem:[#allocation3 + $0x70] sm:$0xff] %vm960, %v958
        %976 = vst.msk [vmem:[#allocation3 + $0x78] sm:$0xff] %vm960, %v959
        %s977 = smul.u32 %s24, 32
        %s978 = sadd.s32 %s977, 0
        %v979 = vlaneseq
        %v980 = vshrl.u32 %v979, 7
        %v981 = vadd.s32 %v980, 8
        %v982 = vstv %s978
        %v983 = vadd.s32 %v980, %v982
        %v984 = vadd.s32 %v981, %v982
        %vm985 = vcmp.lt.s32.totalorder %v983, 56
        %vm986 = vcmp.lt.s32.totalorder %v984, 56
        %v987 = vsel %vm985, 1.0, 0.0
        %v988 = vsel %vm986, 1.0, 0.0
        // Predicated region
        $region61: #{tpu_custom_call.1} parent=55 // pred_check
          %p989 = pneg %p406
        $region62: #{tpu_custom_call.1} parent=55 // pred_check_branch
          %991 = sbr.rel (%p989) target = $region64
        $region63: #{tpu_custom_call.1} parent=55 // pred_region
          %v992 = vmul.f32 %v728, %v987
          %v993 = vmul.f32 %v729, %v988
          %v994 = vsel %vm680, %v992, 0.0
          %v995 = vsel %vm680, %v993, 0.0
          %v996 = vadd.f32 %v994, %v995
          %v997 = vrot.slane %v996, 4
          %v998 = vadd.f32 %v996, %v997
          %v999 = vrot.slane %v998, 2
          %v1000 = vadd.f32 %v998, %v999
          %v1001 = vrot.slane %v1000, 1
          %v1002 = vadd.f32 %v1000, %v1001
          %v1003 = vmul.f32 %v1002, 0.0625
          %vm1004 = vcmask 253952
          %1005 = vst.msk [vmem:[#allocation4] sm:$0x1] %vm1004, %v1003
        $region64: #{tpu_custom_call.1} parent=55 // pred_fallthru
          _
        %v1006 = vld [vmem:[#allocation4] sm:$0x1]
        %v1008 = vperm.slane %v1006, 0
        %v1010 = vsub.f32 %v728, %v1008
        %v1011 = vsub.f32 %v729, %v1008
        %v1012 = vmul.f32 %v1010, %v987
        %v1013 = vmul.f32 %v1011, %v988
        %v1014 = vld [vmem:[#allocation5] sm:$0x1]
        %v1015 = vsel %vm680, %v1012, 0.0
        %v1016 = vsel %vm680, %v1013, 0.0
        %v1017 = vadd.f32 %v1015, %v1016
        %v1018 = vrot.slane %v1017, 4
        %v1019 = vadd.f32 %v1017, %v1018
        %v1020 = vrot.slane %v1019, 2
        %v1021 = vadd.f32 %v1019, %v1020
        %v1022 = vrot.slane %v1021, 1
        %v1023 = vadd.f32 %v1021, %v1022
        %v1024 = vadd.f32 %v1014, %v1023
        %vm1025 = vcmask 253952
        %1026 = vst.msk [vmem:[#allocation5] sm:$0x1] %vm1025, %v1024
        %v1027 = vld [vmem:[#allocation6] sm:$0x1]
        %v1028 = vmul.f32 %v1012, %v1012
        %v1029 = vmul.f32 %v1013, %v1013
        %v1030 = vsel %vm680, %v1028, 0.0
        %v1031 = vsel %vm680, %v1029, 0.0
        %v1032 = vadd.f32 %v1030, %v1031
        %v1033 = vrot.slane %v1032, 4
        %v1034 = vadd.f32 %v1032, %v1033
        %v1035 = vrot.slane %v1034, 2
        %v1036 = vadd.f32 %v1034, %v1035
        %v1037 = vrot.slane %v1036, 1
        %v1038 = vadd.f32 %v1036, %v1037
        %v1039 = vadd.f32 %v1027, %v1038
        %1040 = vst.msk [vmem:[#allocation6] sm:$0x1] %vm1025, %v1039
        %s1041 = scalar_lea.vmem %s393, 16
        %v1042 = vld [vmem:[%s1041] sm:$0xff]
        %v1043 = vld [vmem:[%s1041 + $0x8] sm:$0xff]
        %1044 = vset.pattern.permute.xlu0 0
        %1045 = vperm.xlu0 %1044, %v1042
        %v1046 = vpop.permute.xlu0 %1045
        %1047 = vset.pattern.permute.xlu0 0
        %1048 = vperm.xlu0 %1047, %v1043
        %v1049 = vpop.permute.xlu0 %1048
        %vm1050 = vcmp.eq.s32.totalorder %v603, %v1046
        %vm1051 = vcmp.eq.s32.totalorder %v603, %v1049
        %v1052 = vsel %vm1050, 1.0, 0.0
        %v1053 = vsel %vm1051, 1.0, 0.0
        %1054 = vset.pattern.permute.xlu0 1
        %1055 = vperm.xlu0 %1054, %v1042
        %v1056 = vpop.permute.xlu0 %1055
        %1057 = vset.pattern.permute.xlu0 1
        %1058 = vperm.xlu0 %1057, %v1043
        %v1059 = vpop.permute.xlu0 %1058
        %vm1060 = vcmp.eq.s32.totalorder %v603, %v1056
        %vm1061 = vcmp.eq.s32.totalorder %v603, %v1059
        %v1062 = vsel %vm1060, 1.0, 0.0
        %v1063 = vsel %vm1061, 1.0, 0.0
        %1064 = vmatpush.msra.mxu0 %v599
        %1065 = vmatpush.msra.mxu0 %v598
        %1066 = vmatpush.msra.mxu0 %v597
        %1067 = vmatpush.msra.mxu0 %v596
        %1068 = vmatpush.msra.mxu0 %v595
        %1069 = vmatpush.msra.mxu0 %v594
        %1070 = vmatpush.msra.mxu0 %v593
        %1071 = vmatpush.msra.mxu0 %v592
        %1072 = vmatpush.msra.mxu0 %v591
        %1073 = vmatpush.msra.mxu0 %v590
        %1074 = vmatpush.msra.mxu0 %v589
        %1075 = vmatpush.msra.mxu0 %v588
        %1076 = vmatpush.msra.mxu0 %v587
        %1077 = vmatpush.msra.mxu0 %v586
        %1078 = vmatpush.msra.mxu0 %v585
        %1079 = vmatpush.msra.mxu0 %v584
        %1080 = vmatmul.f32.gmra.mxu0 %v1052
        %v1081 = vpop.f32.mrf.mxu0
        %v1082 = vadd.f32 0.0, %v1081
        %1083 = vmatmul.f32.gmra.mxu0 %v1053
        %v1084 = vpop.f32.mrf.mxu0
        %v1085 = vadd.f32 0.0, %v1084
        %1086 = vdwg.mxu0
        %1087 = vmatpush.msra.mxu0 %v599
        %1088 = vmatpush.msra.mxu0 %v598
        %1089 = vmatpush.msra.mxu0 %v597
        %1090 = vmatpush.msra.mxu0 %v596
        %1091 = vmatpush.msra.mxu0 %v595
        %1092 = vmatpush.msra.mxu0 %v594
        %1093 = vmatpush.msra.mxu0 %v593
        %1094 = vmatpush.msra.mxu0 %v592
        %1095 = vmatpush.msra.mxu0 %v591
        %1096 = vmatpush.msra.mxu0 %v590
        %1097 = vmatpush.msra.mxu0 %v589
        %1098 = vmatpush.msra.mxu0 %v588
        %1099 = vmatpush.msra.mxu0 %v587
        %1100 = vmatpush.msra.mxu0 %v586
        %1101 = vmatpush.msra.mxu0 %v585
        %1102 = vmatpush.msra.mxu0 %v584
        %1103 = vmatmul.f32.gmra.mxu0 %v1062
        %v1104 = vpop.f32.mrf.mxu0
        %v1105 = vadd.f32 0.0, %v1104
        %1106 = vmatmul.f32.gmra.mxu0 %v1063
        %v1107 = vpop.f32.mrf.mxu0
        %v1108 = vadd.f32 0.0, %v1107
        %1109 = vdwg.mxu0
        %s1110 = scalar_lea.vmem %s398, 16
        %v1111 = vld [vmem:[%s1110] sm:$0xff]
        %v1112 = vld [vmem:[%s1110 + $0x8] sm:$0xff]
        %v1113 = vld [vmem:[%s5] sm:$0xff]
        %v1114 = vld [vmem:[%s5 + $0x8] sm:$0xff]
        %v1115 = vld [vmem:[%s5 + $0x10] sm:$0xff]
        %v1116 = vld [vmem:[%s5 + $0x18] sm:$0xff]
        %v1117 = vld [vmem:[%s6] sm:$0x1]
        %v1119 = vperm.slane %v1117, 0
        %v1122 = vsel %vm680, %v1111, 0
        %v1125 = vsel %vm680, %v1112, 0
        %1127 = vmatpush.msra.mxu0 0.0
        %1128 = vmatpush.msra.mxu0 0.0
        %1129 = vmatpush.msra.mxu0 0.0
        %1130 = vmatpush.msra.mxu0 0.0
        %1131 = vmatpush.msra.mxu0 0.0
        %1132 = vmatpush.msra.mxu0 0.0
        %1133 = vmatpush.msra.mxu0 0.0
        %1134 = vmatpush.msra.mxu0 0.0
        %1135 = vmatpush.msra.mxu0 0.0
        %1136 = vmatpush.msra.mxu0 0.0
        %1137 = vmatpush.msra.mxu0 0.0
        %1138 = vmatpush.msra.mxu0 0.0
        %1139 = vmatpush.msra.mxu0 %v1116
        %1140 = vmatpush.msra.mxu0 %v1115
        %1141 = vmatpush.msra.mxu0 %v1114
        %1142 = vmatpush.msra.mxu0 %v1113
        %1143 = vmatmul.f32.gmra.mxu0 %v1122
        %v1144 = vpop.f32.mrf.mxu0
        %v1145 = vadd.f32 %v1119, %v1144
        %1146 = vmatmul.f32.gmra.mxu0 %v1125
        %v1147 = vpop.f32.mrf.mxu0
        %v1148 = vadd.f32 %v1119, %v1147
        %1149 = vdwg.mxu0
        %1152 = vrot.lane.b32.xlu0 %v1082, 96
        %v1153 = vpop.permute.xlu0 %1152
        %1154 = vrot.lane.b32.xlu0 %v1085, 96
        %v1155 = vpop.permute.xlu0 %1154
        %v1158 = vadd.f32 %v1145, %v1153
        %v1159 = vadd.f32 %v1148, %v1155
        %1162 = vrot.lane.b32.xlu0 %v1105, 64
        %v1163 = vpop.permute.xlu0 %1162
        %1164 = vrot.lane.b32.xlu0 %v1108, 64
        %v1165 = vpop.permute.xlu0 %1164
        %v1168 = vadd.f32 %v1158, %v1163
        %v1169 = vadd.f32 %v1159, %v1165
        %s1170 = scalar_lea.vmem %s404, 16
        %1171 = vst.msk [vmem:[%s1170] sm:$0xff] %vm680, %v1168
        %1172 = vst.msk [vmem:[%s1170 + $0x8] sm:$0xff] %vm680, %v1169
        %v1173 = vxor.u32 %v1168, 2147483648
        %v1174 = vxor.u32 %v1169, 2147483648
        %v1175 = vmul.f32 %v1173, 1.442695
        %v1176 = vpow.pop %v1175
        %v1177 = vmul.f32 %v1174, 1.442695
        %v1178 = vpow.pop %v1177
        %v1179 = vadd.f32 %v1176, 1.0
        %v1180 = vadd.f32 %v1178, 1.0
        %v1181 = vrcp.pop %v1179
        %v1182 = vmul.f32 %v1179, %v1181
        %v1183 = vsub.f32 1.0, %v1182
        %v1184 = vmul.f32 %v1181, %v1183
        %v1185 = vadd.f32 %v1181, %v1184
        %vm1186 = vweird.f32 %v1179
        %vm1187 = vweird.f32 %v1181
        %vm1188 = vmor %vm1186, %vm1187
        %v1189 = vsel %vm1188, %v1181, %v1185
        %v1190 = vand.u32 2147483647, %v1179
        %vm1191 = vcmp.eq.f32.partialorder %v1190, 8.507059e+37
        %v1192 = vand.u32 %v1179, 2147483648
        %v1193 = vor.u32 1.1754944e-38, %v1192
        %v1194 = vsel %vm1191, %v1193, %v1189
        %v1195 = vmul.f32 1.0, %v1194
        %v1196 = vrcp.pop %v1180
        %v1197 = vmul.f32 %v1180, %v1196
        %v1198 = vsub.f32 1.0, %v1197
        %v1199 = vmul.f32 %v1196, %v1198
        %v1200 = vadd.f32 %v1196, %v1199
        %vm1201 = vweird.f32 %v1180
        %vm1202 = vweird.f32 %v1196
        %vm1203 = vmor %vm1201, %vm1202
        %v1204 = vsel %vm1203, %v1196, %v1200
        %v1205 = vand.u32 2147483647, %v1180
        %vm1206 = vcmp.eq.f32.partialorder %v1205, 8.507059e+37
        %v1207 = vand.u32 %v1180, 2147483648
        %v1208 = vor.u32 1.1754944e-38, %v1207
        %v1209 = vsel %vm1206, %v1208, %v1204
        %v1210 = vmul.f32 1.0, %v1209
        %v1211 = vmul.f32 %v1195, %v1082
        %v1212 = vmul.f32 %v1210, %v1085
        %1215 = vrot.lane.b32.xlu0 %v1195, 32
        %v1216 = vpop.permute.xlu0 %1215
        %1217 = vrot.lane.b32.xlu0 %v1210, 32
        %v1218 = vpop.permute.xlu0 %1217
        %v1221 = vsel %vm680, %v1211, %v1216
        %v1222 = vsel %vm680, %v1212, %v1218
        %v1223 = vld [vmem:[#allocation3] sm:$0xff]
        %v1224 = vld [vmem:[#allocation3 + $0x8] sm:$0xff]
        %v1225 = vld [vmem:[#allocation3 + $0x10] sm:$0xff]
        %v1226 = vld [vmem:[#allocation3 + $0x18] sm:$0xff]
        %v1227 = vld [vmem:[#allocation3 + $0x20] sm:$0xff]
        %v1228 = vld [vmem:[#allocation3 + $0x28] sm:$0xff]
        %v1229 = vld [vmem:[#allocation3 + $0x30] sm:$0xff]
        %v1230 = vld [vmem:[#allocation3 + $0x38] sm:$0xff]
        %v1231 = vld [vmem:[#allocation3 + $0x40] sm:$0xff]
        %v1232 = vld [vmem:[#allocation3 + $0x48] sm:$0xff]
        %v1233 = vld [vmem:[#allocation3 + $0x50] sm:$0xff]
        %v1234 = vld [vmem:[#allocation3 + $0x58] sm:$0xff]
        %v1235 = vld [vmem:[#allocation3 + $0x60] sm:$0xff]
        %v1236 = vld [vmem:[#allocation3 + $0x68] sm:$0xff]
        %v1237 = vld [vmem:[#allocation3 + $0x70] sm:$0xff]
        %v1238 = vld [vmem:[#allocation3 + $0x78] sm:$0xff]
        %1239 = vxpose.xlu0.b32.start [1/16] %v1062, 128
        %1240 = vxpose.xlu0.b32.cont [2/16] %v1063, 128
        %1241 = vxpose.xlu0.b32.cont [3/16] 0.0, 128
        %1242 = vxpose.xlu0.b32.cont [4/16] 0.0, 128
        %1243 = vxpose.xlu0.b32.cont [5/16] 0.0, 128
        %1244 = vxpose.xlu0.b32.cont [6/16] 0.0, 128
        %1245 = vxpose.xlu0.b32.cont [7/16] 0.0, 128
        %1246 = vxpose.xlu0.b32.cont [8/16] 0.0, 128
        %1247 = vxpose.xlu0.b32.cont [9/16] 0.0, 128
        %1248 = vxpose.xlu0.b32.cont [10/16] 0.0, 128
        %1249 = vxpose.xlu0.b32.cont [11/16] 0.0, 128
        %1250 = vxpose.xlu0.b32.cont [12/16] 0.0, 128
        %1251 = vxpose.xlu0.b32.cont [13/16] 0.0, 128
        %1252 = vxpose.xlu0.b32.cont [14/16] 0.0, 128
        %1253 = vxpose.xlu0.b32.cont [15/16] 0.0, 128
        %1254 = vxpose.xlu0.b32.end [16/16] 0.0, 128
        %v1255 = vpop.trf.xlu0
        %v1256 = vpop.trf.xlu0
        %v1257 = vpop.trf.xlu0
        %v1258 = vpop.trf.xlu0
        %v1259 = vpop.trf.xlu0
        %v1260 = vpop.trf.xlu0
        %v1261 = vpop.trf.xlu0
        %v1262 = vpop.trf.xlu0
        %v1263 = vpop.trf.xlu0
        %v1264 = vpop.trf.xlu0
        %v1265 = vpop.trf.xlu0
        %v1266 = vpop.trf.xlu0
        %v1267 = vpop.trf.xlu0
        %v1268 = vpop.trf.xlu0
        %v1269 = vpop.trf.xlu0
        %v1270 = vpop.trf.xlu0
        %v1272 = vsel %vm830, %v1255, 0
        %v1275 = vsel %vm830, %v1256, 0
        %v1278 = vsel %vm830, %v1257, 0
        %v1281 = vsel %vm830, %v1258, 0
        %v1284 = vsel %vm830, %v1259, 0
        %v1287 = vsel %vm830, %v1260, 0
        %v1290 = vsel %vm830, %v1261, 0
        %v1293 = vsel %vm830, %v1262, 0
        %v1296 = vsel %vm830, %v1263, 0
        %v1299 = vsel %vm830, %v1264, 0
        %v1302 = vsel %vm830, %v1265, 0
        %v1305 = vsel %vm830, %v1266, 0
        %v1308 = vsel %vm830, %v1267, 0
        %v1311 = vsel %vm830, %v1268, 0
        %v1314 = vsel %vm830, %v1269, 0
        %v1317 = vsel %vm830, %v1270, 0
        %1319 = vmatpush.msra.mxu0 0.0
        %1320 = vmatpush.msra.mxu0 0.0
        %1321 = vmatpush.msra.mxu0 0.0
        %1322 = vmatpush.msra.mxu0 0.0
        %1323 = vmatpush.msra.mxu0 0.0
        %1324 = vmatpush.msra.mxu0 0.0
        %1325 = vmatpush.msra.mxu0 0.0
        %1326 = vmatpush.msra.mxu0 0.0
        %1327 = vmatpush.msra.mxu0 0.0
        %1328 = vmatpush.msra.mxu0 0.0
        %1329 = vmatpush.msra.mxu0 0.0
        %1330 = vmatpush.msra.mxu0 0.0
        %1331 = vmatpush.msra.mxu0 0.0
        %1332 = vmatpush.msra.mxu0 0.0
        %1333 = vmatpush.msra.mxu0 %v1222
        %1334 = vmatpush.msra.mxu0 %v1221
        %1335 = vmatmul.f32.gmra.mxu0 %v1272
        %v1336 = vpop.f32.mrf.mxu0
        %v1337 = vadd.f32 0.0, %v1336
        %1338 = vmatmul.f32.gmra.mxu0 %v1275
        %v1339 = vpop.f32.mrf.mxu0
        %v1340 = vadd.f32 0.0, %v1339
        %1341 = vmatmul.f32.gmra.mxu0 %v1278
        %v1342 = vpop.f32.mrf.mxu0
        %v1343 = vadd.f32 0.0, %v1342
        %1344 = vmatmul.f32.gmra.mxu0 %v1281
        %v1345 = vpop.f32.mrf.mxu0
        %v1346 = vadd.f32 0.0, %v1345
        %1347 = vmatmul.f32.gmra.mxu0 %v1284
        %v1348 = vpop.f32.mrf.mxu0
        %v1349 = vadd.f32 0.0, %v1348
        %1350 = vmatmul.f32.gmra.mxu0 %v1287
        %v1351 = vpop.f32.mrf.mxu0
        %v1352 = vadd.f32 0.0, %v1351
        %1353 = vmatmul.f32.gmra.mxu0 %v1290
        %v1354 = vpop.f32.mrf.mxu0
        %v1355 = vadd.f32 0.0, %v1354
        %1356 = vmatmul.f32.gmra.mxu0 %v1293
        %v1357 = vpop.f32.mrf.mxu0
        %v1358 = vadd.f32 0.0, %v1357
        %1359 = vmatmul.f32.gmra.mxu0 %v1296
        %v1360 = vpop.f32.mrf.mxu0
        %v1361 = vadd.f32 0.0, %v1360
        %1362 = vmatmul.f32.gmra.mxu0 %v1299
        %v1363 = vpop.f32.mrf.mxu0
        %v1364 = vadd.f32 0.0, %v1363
        %1365 = vmatmul.f32.gmra.mxu0 %v1302
        %v1366 = vpop.f32.mrf.mxu0
        %v1367 = vadd.f32 0.0, %v1366
        %1368 = vmatmul.f32.gmra.mxu0 %v1305
        %v1369 = vpop.f32.mrf.mxu0
        %v1370 = vadd.f32 0.0, %v1369
        %1371 = vmatmul.f32.gmra.mxu0 %v1308
        %v1372 = vpop.f32.mrf.mxu0
        %v1373 = vadd.f32 0.0, %v1372
        %1374 = vmatmul.f32.gmra.mxu0 %v1311
        %v1375 = vpop.f32.mrf.mxu0
        %v1376 = vadd.f32 0.0, %v1375
        %1377 = vmatmul.f32.gmra.mxu0 %v1314
        %v1378 = vpop.f32.mrf.mxu0
        %v1379 = vadd.f32 0.0, %v1378
        %1380 = vmatmul.f32.gmra.mxu0 %v1317
        %v1381 = vpop.f32.mrf.mxu0
        %v1382 = vadd.f32 0.0, %v1381
        %1383 = vdwg.mxu0
        %v1384 = vadd.f32 %v1223, %v1337
        %v1385 = vadd.f32 %v1224, %v1340
        %v1386 = vadd.f32 %v1225, %v1343
        %v1387 = vadd.f32 %v1226, %v1346
        %v1388 = vadd.f32 %v1227, %v1349
        %v1389 = vadd.f32 %v1228, %v1352
        %v1390 = vadd.f32 %v1229, %v1355
        %v1391 = vadd.f32 %v1230, %v1358
        %v1392 = vadd.f32 %v1231, %v1361
        %v1393 = vadd.f32 %v1232, %v1364
        %v1394 = vadd.f32 %v1233, %v1367
        %v1395 = vadd.f32 %v1234, %v1370
        %v1396 = vadd.f32 %v1235, %v1373
        %v1397 = vadd.f32 %v1236, %v1376
        %v1398 = vadd.f32 %v1237, %v1379
        %v1399 = vadd.f32 %v1238, %v1382
        %1400 = vst.msk [vmem:[#allocation3] sm:$0xff] %vm960, %v1384
        %1401 = vst.msk [vmem:[#allocation3 + $0x8] sm:$0xff] %vm960, %v1385
        %1402 = vst.msk [vmem:[#allocation3 + $0x10] sm:$0xff] %vm960, %v1386
        %1403 = vst.msk [vmem:[#allocation3 + $0x18] sm:$0xff] %vm960, %v1387
        %1404 = vst.msk [vmem:[#allocation3 + $0x20] sm:$0xff] %vm960, %v1388
        %1405 = vst.msk [vmem:[#allocation3 + $0x28] sm:$0xff] %vm960, %v1389
        %1406 = vst.msk [vmem:[#allocation3 + $0x30] sm:$0xff] %vm960, %v1390
        %1407 = vst.msk [vmem:[#allocation3 + $0x38] sm:$0xff] %vm960, %v1391
        %1408 = vst.msk [vmem:[#allocation3 + $0x40] sm:$0xff] %vm960, %v1392
        %1409 = vst.msk [vmem:[#allocation3 + $0x48] sm:$0xff] %vm960, %v1393
        %1410 = vst.msk [vmem:[#allocation3 + $0x50] sm:$0xff] %vm960, %v1394
        %1411 = vst.msk [vmem:[#allocation3 + $0x58] sm:$0xff] %vm960, %v1395
        %1412 = vst.msk [vmem:[#allocation3 + $0x60] sm:$0xff] %vm960, %v1396
        %1413 = vst.msk [vmem:[#allocation3 + $0x68] sm:$0xff] %vm960, %v1397
        %1414 = vst.msk [vmem:[#allocation3 + $0x70] sm:$0xff] %vm960, %v1398
        %1415 = vst.msk [vmem:[#allocation3 + $0x78] sm:$0xff] %vm960, %v1399
        %s1416 = sadd.s32 %s977, 16
        %v1417 = vstv %s1416
        %v1418 = vadd.s32 %v980, %v1417
        %v1419 = vadd.s32 %v981, %v1417
        %vm1420 = vcmp.lt.s32.totalorder %v1418, 56
        %vm1421 = vcmp.lt.s32.totalorder %v1419, 56
        %v1422 = vsel %vm1420, 1.0, 0.0
        %v1423 = vsel %vm1421, 1.0, 0.0
        %v1424 = vld [vmem:[#allocation4] sm:$0x1]
        %v1426 = vperm.slane %v1424, 0
        %v1428 = vsub.f32 %v1168, %v1426
        %v1429 = vsub.f32 %v1169, %v1426
        %v1430 = vmul.f32 %v1428, %v1422
        %v1431 = vmul.f32 %v1429, %v1423
        %v1432 = vld [vmem:[#allocation5] sm:$0x1]
        %v1433 = vsel %vm680, %v1430, 0.0
        %v1434 = vsel %vm680, %v1431, 0.0
        %v1435 = vadd.f32 %v1433, %v1434
        %v1436 = vrot.slane %v1435, 4
        %v1437 = vadd.f32 %v1435, %v1436
        %v1438 = vrot.slane %v1437, 2
        %v1439 = vadd.f32 %v1437, %v1438
        %v1440 = vrot.slane %v1439, 1
        %v1441 = vadd.f32 %v1439, %v1440
        %v1442 = vadd.f32 %v1432, %v1441
        %1443 = vst.msk [vmem:[#allocation5] sm:$0x1] %vm1025, %v1442
        %v1444 = vld [vmem:[#allocation6] sm:$0x1]
        %v1445 = vmul.f32 %v1430, %v1430
        %v1446 = vmul.f32 %v1431, %v1431
        %v1447 = vsel %vm680, %v1445, 0.0
        %v1448 = vsel %vm680, %v1446, 0.0
        %v1449 = vadd.f32 %v1447, %v1448
        %v1450 = vrot.slane %v1449, 4
        %v1451 = vadd.f32 %v1449, %v1450
        %v1452 = vrot.slane %v1451, 2
        %v1453 = vadd.f32 %v1451, %v1452
        %v1454 = vrot.slane %v1453, 1
        %v1455 = vadd.f32 %v1453, %v1454
        %v1456 = vadd.f32 %v1444, %v1455
        %1457 = vst.msk [vmem:[#allocation6] sm:$0x1] %vm1025, %v1456
        %p1458 = scmp.eq.s32.totalorder %s24, 1
        // Predicated region
        $region65: #{tpu_custom_call.1} parent=55 // pred_check
          %p1459 = pneg %p1458
        $region66: #{tpu_custom_call.1} parent=55 // pred_check_branch
          %1461 = sbr.rel (%p1459) target = $region68
        $region67: #{tpu_custom_call.1} parent=55 // pred_region
          %v1462 = vld [vmem:[#allocation3] sm:$0xff]
          %v1463 = vld [vmem:[#allocation3 + $0x8] sm:$0xff]
          %v1464 = vld [vmem:[#allocation3 + $0x10] sm:$0xff]
          %v1465 = vld [vmem:[#allocation3 + $0x18] sm:$0xff]
          %v1466 = vld [vmem:[#allocation3 + $0x20] sm:$0xff]
          %v1467 = vld [vmem:[#allocation3 + $0x28] sm:$0xff]
          %v1468 = vld [vmem:[#allocation3 + $0x30] sm:$0xff]
          %v1469 = vld [vmem:[#allocation3 + $0x38] sm:$0xff]
          %v1470 = vld [vmem:[#allocation3 + $0x40] sm:$0xff]
          %v1471 = vld [vmem:[#allocation3 + $0x48] sm:$0xff]
          %v1472 = vld [vmem:[#allocation3 + $0x50] sm:$0xff]
          %v1473 = vld [vmem:[#allocation3 + $0x58] sm:$0xff]
          %v1474 = vld [vmem:[#allocation3 + $0x60] sm:$0xff]
          %v1475 = vld [vmem:[#allocation3 + $0x68] sm:$0xff]
          %v1476 = vld [vmem:[#allocation3 + $0x70] sm:$0xff]
          %v1477 = vld [vmem:[#allocation3 + $0x78] sm:$0xff]
          %v1478 = vadd.f32 %v1462, 1e-06
          %v1479 = vadd.f32 %v1463, 1e-06
          %v1480 = vadd.f32 %v1464, 1e-06
          %v1481 = vadd.f32 %v1465, 1e-06
          %v1482 = vadd.f32 %v1466, 1e-06
          %v1483 = vadd.f32 %v1467, 1e-06
          %v1484 = vadd.f32 %v1468, 1e-06
          %v1485 = vadd.f32 %v1469, 1e-06
          %v1486 = vadd.f32 %v1470, 1e-06
          %v1487 = vadd.f32 %v1471, 1e-06
          %v1488 = vadd.f32 %v1472, 1e-06
          %v1489 = vadd.f32 %v1473, 1e-06
          %v1490 = vadd.f32 %v1474, 1e-06
          %v1491 = vadd.f32 %v1475, 1e-06
          %v1492 = vadd.f32 %v1476, 1e-06
          %v1493 = vadd.f32 %v1477, 1e-06
          %v1494 = vrcp.pop %v1478
          %v1495 = vmul.f32 %v1478, %v1494
          %v1496 = vsub.f32 1.0, %v1495
          %v1497 = vmul.f32 %v1494, %v1496
          %v1498 = vadd.f32 %v1494, %v1497
          %vm1499 = vweird.f32 %v1478
          %vm1500 = vweird.f32 %v1494
          %vm1501 = vmor %vm1499, %vm1500
          %v1502 = vsel %vm1501, %v1494, %v1498
          %v1503 = vand.u32 2147483647, %v1478
          %vm1504 = vcmp.eq.f32.partialorder %v1503, 8.507059e+37
          %v1505 = vand.u32 %v1478, 2147483648
          %v1506 = vor.u32 1.1754944e-38, %v1505
          %v1507 = vsel %vm1504, %v1506, %v1502
          %v1508 = vrcp.pop %v1479
          %v1509 = vmul.f32 %v1479, %v1508
          %v1510 = vsub.f32 1.0, %v1509
          %v1511 = vmul.f32 %v1508, %v1510
          %v1512 = vadd.f32 %v1508, %v1511
          %vm1513 = vweird.f32 %v1479
          %vm1514 = vweird.f32 %v1508
          %vm1515 = vmor %vm1513, %vm1514
          %v1516 = vsel %vm1515, %v1508, %v1512
          %v1517 = vand.u32 2147483647, %v1479
          %vm1518 = vcmp.eq.f32.partialorder %v1517, 8.507059e+37
          %v1519 = vand.u32 %v1479, 2147483648
          %v1520 = vor.u32 1.1754944e-38, %v1519
          %v1521 = vsel %vm1518, %v1520, %v1516
          %v1522 = vrcp.pop %v1480
          %v1523 = vmul.f32 %v1480, %v1522
          %v1524 = vsub.f32 1.0, %v1523
          %v1525 = vmul.f32 %v1522, %v1524
          %v1526 = vadd.f32 %v1522, %v1525
          %vm1527 = vweird.f32 %v1480
          %vm1528 = vweird.f32 %v1522
          %vm1529 = vmor %vm1527, %vm1528
          %v1530 = vsel %vm1529, %v1522, %v1526
          %v1531 = vand.u32 2147483647, %v1480
          %vm1532 = vcmp.eq.f32.partialorder %v1531, 8.507059e+37
          %v1533 = vand.u32 %v1480, 2147483648
          %v1534 = vor.u32 1.1754944e-38, %v1533
          %v1535 = vsel %vm1532, %v1534, %v1530
          %v1536 = vrcp.pop %v1481
          %v1537 = vmul.f32 %v1481, %v1536
          %v1538 = vsub.f32 1.0, %v1537
          %v1539 = vmul.f32 %v1536, %v1538
          %v1540 = vadd.f32 %v1536, %v1539
          %vm1541 = vweird.f32 %v1481
          %vm1542 = vweird.f32 %v1536
          %vm1543 = vmor %vm1541, %vm1542
          %v1544 = vsel %vm1543, %v1536, %v1540
          %v1545 = vand.u32 2147483647, %v1481
          %vm1546 = vcmp.eq.f32.partialorder %v1545, 8.507059e+37
          %v1547 = vand.u32 %v1481, 2147483648
          %v1548 = vor.u32 1.1754944e-38, %v1547
          %v1549 = vsel %vm1546, %v1548, %v1544
          %v1550 = vrcp.pop %v1482
          %v1551 = vmul.f32 %v1482, %v1550
          %v1552 = vsub.f32 1.0, %v1551
          %v1553 = vmul.f32 %v1550, %v1552
          %v1554 = vadd.f32 %v1550, %v1553
          %vm1555 = vweird.f32 %v1482
          %vm1556 = vweird.f32 %v1550
          %vm1557 = vmor %vm1555, %vm1556
          %v1558 = vsel %vm1557, %v1550, %v1554
          %v1559 = vand.u32 2147483647, %v1482
          %vm1560 = vcmp.eq.f32.partialorder %v1559, 8.507059e+37
          %v1561 = vand.u32 %v1482, 2147483648
          %v1562 = vor.u32 1.1754944e-38, %v1561
          %v1563 = vsel %vm1560, %v1562, %v1558
          %v1564 = vrcp.pop %v1483
          %v1565 = vmul.f32 %v1483, %v1564
          %v1566 = vsub.f32 1.0, %v1565
          %v1567 = vmul.f32 %v1564, %v1566
          %v1568 = vadd.f32 %v1564, %v1567
          %vm1569 = vweird.f32 %v1483
          %vm1570 = vweird.f32 %v1564
          %vm1571 = vmor %vm1569, %vm1570
          %v1572 = vsel %vm1571, %v1564, %v1568
          %v1573 = vand.u32 2147483647, %v1483
          %vm1574 = vcmp.eq.f32.partialorder %v1573, 8.507059e+37
          %v1575 = vand.u32 %v1483, 2147483648
          %v1576 = vor.u32 1.1754944e-38, %v1575
          %v1577 = vsel %vm1574, %v1576, %v1572
          %v1578 = vrcp.pop %v1484
          %v1579 = vmul.f32 %v1484, %v1578
          %v1580 = vsub.f32 1.0, %v1579
          %v1581 = vmul.f32 %v1578, %v1580
          %v1582 = vadd.f32 %v1578, %v1581
          %vm1583 = vweird.f32 %v1484
          %vm1584 = vweird.f32 %v1578
          %vm1585 = vmor %vm1583, %vm1584
          %v1586 = vsel %vm1585, %v1578, %v1582
          %v1587 = vand.u32 2147483647, %v1484
          %vm1588 = vcmp.eq.f32.partialorder %v1587, 8.507059e+37
          %v1589 = vand.u32 %v1484, 2147483648
          %v1590 = vor.u32 1.1754944e-38, %v1589
          %v1591 = vsel %vm1588, %v1590, %v1586
          %v1592 = vrcp.pop %v1485
          %v1593 = vmul.f32 %v1485, %v1592
          %v1594 = vsub.f32 1.0, %v1593
          %v1595 = vmul.f32 %v1592, %v1594
          %v1596 = vadd.f32 %v1592, %v1595
          %vm1597 = vweird.f32 %v1485
          %vm1598 = vweird.f32 %v1592
          %vm1599 = vmor %vm1597, %vm1598
          %v1600 = vsel %vm1599, %v1592, %v1596
          %v1601 = vand.u32 2147483647, %v1485
          %vm1602 = vcmp.eq.f32.partialorder %v1601, 8.507059e+37
          %v1603 = vand.u32 %v1485, 2147483648
          %v1604 = vor.u32 1.1754944e-38, %v1603
          %v1605 = vsel %vm1602, %v1604, %v1600
          %v1606 = vrcp.pop %v1486
          %v1607 = vmul.f32 %v1486, %v1606
          %v1608 = vsub.f32 1.0, %v1607
          %v1609 = vmul.f32 %v1606, %v1608
          %v1610 = vadd.f32 %v1606, %v1609
          %vm1611 = vweird.f32 %v1486
          %vm1612 = vweird.f32 %v1606
          %vm1613 = vmor %vm1611, %vm1612
          %v1614 = vsel %vm1613, %v1606, %v1610
          %v1615 = vand.u32 2147483647, %v1486
          %vm1616 = vcmp.eq.f32.partialorder %v1615, 8.507059e+37
          %v1617 = vand.u32 %v1486, 2147483648
          %v1618 = vor.u32 1.1754944e-38, %v1617
          %v1619 = vsel %vm1616, %v1618, %v1614
          %v1620 = vrcp.pop %v1487
          %v1621 = vmul.f32 %v1487, %v1620
          %v1622 = vsub.f32 1.0, %v1621
          %v1623 = vmul.f32 %v1620, %v1622
          %v1624 = vadd.f32 %v1620, %v1623
          %vm1625 = vweird.f32 %v1487
          %vm1626 = vweird.f32 %v1620
          %vm1627 = vmor %vm1625, %vm1626
          %v1628 = vsel %vm1627, %v1620, %v1624
          %v1629 = vand.u32 2147483647, %v1487
          %vm1630 = vcmp.eq.f32.partialorder %v1629, 8.507059e+37
          %v1631 = vand.u32 %v1487, 2147483648
          %v1632 = vor.u32 1.1754944e-38, %v1631
          %v1633 = vsel %vm1630, %v1632, %v1628
          %v1634 = vrcp.pop %v1488
          %v1635 = vmul.f32 %v1488, %v1634
          %v1636 = vsub.f32 1.0, %v1635
          %v1637 = vmul.f32 %v1634, %v1636
          %v1638 = vadd.f32 %v1634, %v1637
          %vm1639 = vweird.f32 %v1488
          %vm1640 = vweird.f32 %v1634
          %vm1641 = vmor %vm1639, %vm1640
          %v1642 = vsel %vm1641, %v1634, %v1638
          %v1643 = vand.u32 2147483647, %v1488
          %vm1644 = vcmp.eq.f32.partialorder %v1643, 8.507059e+37
          %v1645 = vand.u32 %v1488, 2147483648
          %v1646 = vor.u32 1.1754944e-38, %v1645
          %v1647 = vsel %vm1644, %v1646, %v1642
          %v1648 = vrcp.pop %v1489
          %v1649 = vmul.f32 %v1489, %v1648
          %v1650 = vsub.f32 1.0, %v1649
          %v1651 = vmul.f32 %v1648, %v1650
          %v1652 = vadd.f32 %v1648, %v1651
          %vm1653 = vweird.f32 %v1489
          %vm1654 = vweird.f32 %v1648
          %vm1655 = vmor %vm1653, %vm1654
          %v1656 = vsel %vm1655, %v1648, %v1652
          %v1657 = vand.u32 2147483647, %v1489
          %vm1658 = vcmp.eq.f32.partialorder %v1657, 8.507059e+37
          %v1659 = vand.u32 %v1489, 2147483648
          %v1660 = vor.u32 1.1754944e-38, %v1659
          %v1661 = vsel %vm1658, %v1660, %v1656
          %v1662 = vrcp.pop %v1490
          %v1663 = vmul.f32 %v1490, %v1662
          %v1664 = vsub.f32 1.0, %v1663
          %v1665 = vmul.f32 %v1662, %v1664
          %v1666 = vadd.f32 %v1662, %v1665
          %vm1667 = vweird.f32 %v1490
          %vm1668 = vweird.f32 %v1662
          %vm1669 = vmor %vm1667, %vm1668
          %v1670 = vsel %vm1669, %v1662, %v1666
          %v1671 = vand.u32 2147483647, %v1490
          %vm1672 = vcmp.eq.f32.partialorder %v1671, 8.507059e+37
          %v1673 = vand.u32 %v1490, 2147483648
          %v1674 = vor.u32 1.1754944e-38, %v1673
          %v1675 = vsel %vm1672, %v1674, %v1670
          %v1676 = vrcp.pop %v1491
          %v1677 = vmul.f32 %v1491, %v1676
          %v1678 = vsub.f32 1.0, %v1677
          %v1679 = vmul.f32 %v1676, %v1678
          %v1680 = vadd.f32 %v1676, %v1679
          %vm1681 = vweird.f32 %v1491
          %vm1682 = vweird.f32 %v1676
          %vm1683 = vmor %vm1681, %vm1682
          %v1684 = vsel %vm1683, %v1676, %v1680
          %v1685 = vand.u32 2147483647, %v1491
          %vm1686 = vcmp.eq.f32.partialorder %v1685, 8.507059e+37
          %v1687 = vand.u32 %v1491, 2147483648
          %v1688 = vor.u32 1.1754944e-38, %v1687
          %v1689 = vsel %vm1686, %v1688, %v1684
          %v1690 = vrcp.pop %v1492
          %v1691 = vmul.f32 %v1492, %v1690
          %v1692 = vsub.f32 1.0, %v1691
          %v1693 = vmul.f32 %v1690, %v1692
          %v1694 = vadd.f32 %v1690, %v1693
          %vm1695 = vweird.f32 %v1492
          %vm1696 = vweird.f32 %v1690
          %vm1697 = vmor %vm1695, %vm1696
          %v1698 = vsel %vm1697, %v1690, %v1694
          %v1699 = vand.u32 2147483647, %v1492
          %vm1700 = vcmp.eq.f32.partialorder %v1699, 8.507059e+37
          %v1701 = vand.u32 %v1492, 2147483648
          %v1702 = vor.u32 1.1754944e-38, %v1701
          %v1703 = vsel %vm1700, %v1702, %v1698
          %v1704 = vrcp.pop %v1493
          %v1705 = vmul.f32 %v1493, %v1704
          %v1706 = vsub.f32 1.0, %v1705
          %v1707 = vmul.f32 %v1704, %v1706
          %v1708 = vadd.f32 %v1704, %v1707
          %vm1709 = vweird.f32 %v1493
          %vm1710 = vweird.f32 %v1704
          %vm1711 = vmor %vm1709, %vm1710
          %v1712 = vsel %vm1711, %v1704, %v1708
          %v1713 = vand.u32 2147483647, %v1493
          %vm1714 = vcmp.eq.f32.partialorder %v1713, 8.507059e+37
          %v1715 = vand.u32 %v1493, 2147483648
          %v1716 = vor.u32 1.1754944e-38, %v1715
          %v1717 = vsel %vm1714, %v1716, %v1712
          %1734 = vrot.lane.b32.xlu0 %v1507, 96
          %v1735 = vpop.permute.xlu0 %1734
          %1736 = vrot.lane.b32.xlu0 %v1521, 96
          %v1737 = vpop.permute.xlu0 %1736
          %1738 = vrot.lane.b32.xlu0 %v1535, 96
          %v1739 = vpop.permute.xlu0 %1738
          %1740 = vrot.lane.b32.xlu0 %v1549, 96
          %v1741 = vpop.permute.xlu0 %1740
          %1742 = vrot.lane.b32.xlu0 %v1563, 96
          %v1743 = vpop.permute.xlu0 %1742
          %1744 = vrot.lane.b32.xlu0 %v1577, 96
          %v1745 = vpop.permute.xlu0 %1744
          %1746 = vrot.lane.b32.xlu0 %v1591, 96
          %v1747 = vpop.permute.xlu0 %1746
          %1748 = vrot.lane.b32.xlu0 %v1605, 96
          %v1749 = vpop.permute.xlu0 %1748
          %1750 = vrot.lane.b32.xlu0 %v1619, 96
          %v1751 = vpop.permute.xlu0 %1750
          %1752 = vrot.lane.b32.xlu0 %v1633, 96
          %v1753 = vpop.permute.xlu0 %1752
          %1754 = vrot.lane.b32.xlu0 %v1647, 96
          %v1755 = vpop.permute.xlu0 %1754
          %1756 = vrot.lane.b32.xlu0 %v1661, 96
          %v1757 = vpop.permute.xlu0 %1756
          %1758 = vrot.lane.b32.xlu0 %v1675, 96
          %v1759 = vpop.permute.xlu0 %1758
          %1760 = vrot.lane.b32.xlu0 %v1689, 96
          %v1761 = vpop.permute.xlu0 %1760
          %1762 = vrot.lane.b32.xlu0 %v1703, 96
          %v1763 = vpop.permute.xlu0 %1762
          %1764 = vrot.lane.b32.xlu0 %v1717, 96
          %v1765 = vpop.permute.xlu0 %1764
          %v1782 = vmul.f32 %v1462, %v1735
          %v1783 = vmul.f32 %v1463, %v1737
          %v1784 = vmul.f32 %v1464, %v1739
          %v1785 = vmul.f32 %v1465, %v1741
          %v1786 = vmul.f32 %v1466, %v1743
          %v1787 = vmul.f32 %v1467, %v1745
          %v1788 = vmul.f32 %v1468, %v1747
          %v1789 = vmul.f32 %v1469, %v1749
          %v1790 = vmul.f32 %v1470, %v1751
          %v1791 = vmul.f32 %v1471, %v1753
          %v1792 = vmul.f32 %v1472, %v1755
          %v1793 = vmul.f32 %v1473, %v1757
          %v1794 = vmul.f32 %v1474, %v1759
          %v1795 = vmul.f32 %v1475, %v1761
          %v1796 = vmul.f32 %v1476, %v1763
          %v1797 = vmul.f32 %v1477, %v1765
          %1814 = vrot.lane.b32.xlu0 %v1782, 96
          %v1815 = vpop.permute.xlu0 %1814
          %1816 = vrot.lane.b32.xlu0 %v1783, 96
          %v1817 = vpop.permute.xlu0 %1816
          %1818 = vrot.lane.b32.xlu0 %v1784, 96
          %v1819 = vpop.permute.xlu0 %1818
          %1820 = vrot.lane.b32.xlu0 %v1785, 96
          %v1821 = vpop.permute.xlu0 %1820
          %1822 = vrot.lane.b32.xlu0 %v1786, 96
          %v1823 = vpop.permute.xlu0 %1822
          %1824 = vrot.lane.b32.xlu0 %v1787, 96
          %v1825 = vpop.permute.xlu0 %1824
          %1826 = vrot.lane.b32.xlu0 %v1788, 96
          %v1827 = vpop.permute.xlu0 %1826
          %1828 = vrot.lane.b32.xlu0 %v1789, 96
          %v1829 = vpop.permute.xlu0 %1828
          %1830 = vrot.lane.b32.xlu0 %v1790, 96
          %v1831 = vpop.permute.xlu0 %1830
          %1832 = vrot.lane.b32.xlu0 %v1791, 96
          %v1833 = vpop.permute.xlu0 %1832
          %1834 = vrot.lane.b32.xlu0 %v1792, 96
          %v1835 = vpop.permute.xlu0 %1834
          %1836 = vrot.lane.b32.xlu0 %v1793, 96
          %v1837 = vpop.permute.xlu0 %1836
          %1838 = vrot.lane.b32.xlu0 %v1794, 96
          %v1839 = vpop.permute.xlu0 %1838
          %1840 = vrot.lane.b32.xlu0 %v1795, 96
          %v1841 = vpop.permute.xlu0 %1840
          %1842 = vrot.lane.b32.xlu0 %v1796, 96
          %v1843 = vpop.permute.xlu0 %1842
          %1844 = vrot.lane.b32.xlu0 %v1797, 96
          %v1845 = vpop.permute.xlu0 %1844
          %v1862 = vadd.f32 %v584, %v1815
          %v1863 = vadd.f32 %v585, %v1817
          %v1864 = vadd.f32 %v586, %v1819
          %v1865 = vadd.f32 %v587, %v1821
          %v1866 = vadd.f32 %v588, %v1823
          %v1867 = vadd.f32 %v589, %v1825
          %v1868 = vadd.f32 %v590, %v1827
          %v1869 = vadd.f32 %v591, %v1829
          %v1870 = vadd.f32 %v592, %v1831
          %v1871 = vadd.f32 %v593, %v1833
          %v1872 = vadd.f32 %v594, %v1835
          %v1873 = vadd.f32 %v595, %v1837
          %v1874 = vadd.f32 %v596, %v1839
          %v1875 = vadd.f32 %v597, %v1841
          %v1876 = vadd.f32 %v598, %v1843
          %v1877 = vadd.f32 %v599, %v1845
          %v1878 = vadd.s32 %v980, 16
          %v1879 = vadd.s32 %v980, 24
          %v1880 = vadd.s32 %v980, 32
          %v1881 = vadd.s32 %v980, 40
          %v1882 = vadd.s32 %v980, 48
          %v1883 = vadd.s32 %v980, 56
          %v1884 = vadd.s32 %v980, 64
          %v1885 = vadd.s32 %v980, 72
          %v1886 = vadd.s32 %v980, 80
          %v1887 = vadd.s32 %v980, 88
          %v1888 = vadd.s32 %v980, 96
          %v1889 = vadd.s32 %v980, 104
          %v1890 = vadd.s32 %v980, 112
          %v1891 = vadd.s32 %v980, 120
          %vm1892 = vcmp.lt.s32.totalorder %v980, 16
          %vm1893 = vcmp.lt.s32.totalorder %v981, 16
          %vm1894 = vcmp.lt.s32.totalorder %v1878, 16
          %vm1895 = vcmp.lt.s32.totalorder %v1879, 16
          %vm1896 = vcmp.lt.s32.totalorder %v1880, 16
          %vm1897 = vcmp.lt.s32.totalorder %v1881, 16
          %vm1898 = vcmp.lt.s32.totalorder %v1882, 16
          %vm1899 = vcmp.lt.s32.totalorder %v1883, 16
          %vm1900 = vcmp.lt.s32.totalorder %v1884, 16
          %vm1901 = vcmp.lt.s32.totalorder %v1885, 16
          %vm1902 = vcmp.lt.s32.totalorder %v1886, 16
          %vm1903 = vcmp.lt.s32.totalorder %v1887, 16
          %vm1904 = vcmp.lt.s32.totalorder %v1888, 16
          %vm1905 = vcmp.lt.s32.totalorder %v1889, 16
          %vm1906 = vcmp.lt.s32.totalorder %v1890, 16
          %vm1907 = vcmp.lt.s32.totalorder %v1891, 16
          %v1908 = vsel %vm1892, 1.0, 0.0
          %v1909 = vsel %vm1893, 1.0, 0.0
          %v1910 = vsel %vm1894, 1.0, 0.0
          %v1911 = vsel %vm1895, 1.0, 0.0
          %v1912 = vsel %vm1896, 1.0, 0.0
          %v1913 = vsel %vm1897, 1.0, 0.0
          %v1914 = vsel %vm1898, 1.0, 0.0
          %v1915 = vsel %vm1899, 1.0, 0.0
          %v1916 = vsel %vm1900, 1.0, 0.0
          %v1917 = vsel %vm1901, 1.0, 0.0
          %v1918 = vsel %vm1902, 1.0, 0.0
          %v1919 = vsel %vm1903, 1.0, 0.0
          %v1920 = vsel %vm1904, 1.0, 0.0
          %v1921 = vsel %vm1905, 1.0, 0.0
          %v1922 = vsel %vm1906, 1.0, 0.0
          %v1923 = vsel %vm1907, 1.0, 0.0
          %v1924 = vmul.f32 %v1862, %v1908
          %v1925 = vmul.f32 %v1863, %v1909
          %v1926 = vmul.f32 %v1864, %v1910
          %v1927 = vmul.f32 %v1865, %v1911
          %v1928 = vmul.f32 %v1866, %v1912
          %v1929 = vmul.f32 %v1867, %v1913
          %v1930 = vmul.f32 %v1868, %v1914
          %v1931 = vmul.f32 %v1869, %v1915
          %v1932 = vmul.f32 %v1870, %v1916
          %v1933 = vmul.f32 %v1871, %v1917
          %v1934 = vmul.f32 %v1872, %v1918
          %v1935 = vmul.f32 %v1873, %v1919
          %v1936 = vmul.f32 %v1874, %v1920
          %v1937 = vmul.f32 %v1875, %v1921
          %v1938 = vmul.f32 %v1876, %v1922
          %v1939 = vmul.f32 %v1877, %v1923
          %vm1940 = vcmask 1048320
          %v1941 = vsel %vm1940, %v1924, 0.0
          %v1942 = vsel %vm1940, %v1925, 0.0
          %v1943 = vadd.f32 %v1941, %v1942
          %v1944 = vsel %vm1940, %v1926, 0.0
          %v1945 = vadd.f32 %v1943, %v1944
          %v1946 = vsel %vm1940, %v1927, 0.0
          %v1947 = vadd.f32 %v1945, %v1946
          %v1948 = vsel %vm1940, %v1928, 0.0
          %v1949 = vadd.f32 %v1947, %v1948
          %v1950 = vsel %vm1940, %v1929, 0.0
          %v1951 = vadd.f32 %v1949, %v1950
          %v1952 = vsel %vm1940, %v1930, 0.0
          %v1953 = vadd.f32 %v1951, %v1952
          %v1954 = vsel %vm1940, %v1931, 0.0
          %v1955 = vadd.f32 %v1953, %v1954
          %v1956 = vsel %vm1940, %v1932, 0.0
          %v1957 = vadd.f32 %v1955, %v1956
          %v1958 = vsel %vm1940, %v1933, 0.0
          %v1959 = vadd.f32 %v1957, %v1958
          %v1960 = vsel %vm1940, %v1934, 0.0
          %v1961 = vadd.f32 %v1959, %v1960
          %v1962 = vsel %vm1940, %v1935, 0.0
          %v1963 = vadd.f32 %v1961, %v1962
          %v1964 = vsel %vm1940, %v1936, 0.0
          %v1965 = vadd.f32 %v1963, %v1964
          %v1966 = vsel %vm1940, %v1937, 0.0
          %v1967 = vadd.f32 %v1965, %v1966
          %v1968 = vsel %vm1940, %v1938, 0.0
          %v1969 = vadd.f32 %v1967, %v1968
          %v1970 = vsel %vm1940, %v1939, 0.0
          %v1971 = vadd.f32 %v1969, %v1970
          %v1972 = vrot.slane %v1971, 4
          %v1973 = vadd.f32 %v1971, %v1972
          %v1974 = vrot.slane %v1973, 2
          %v1975 = vadd.f32 %v1973, %v1974
          %v1976 = vrot.slane %v1975, 1
          %v1977 = vadd.f32 %v1975, %v1976
          %v1978 = vmul.f32 %v1977, 0.0625
          %v1979 = vsub.f32 %v1862, %v1978
          %v1980 = vsub.f32 %v1863, %v1978
          %v1981 = vsub.f32 %v1864, %v1978
          %v1982 = vsub.f32 %v1865, %v1978
          %v1983 = vsub.f32 %v1866, %v1978
          %v1984 = vsub.f32 %v1867, %v1978
          %v1985 = vsub.f32 %v1868, %v1978
          %v1986 = vsub.f32 %v1869, %v1978
          %v1987 = vsub.f32 %v1870, %v1978
          %v1988 = vsub.f32 %v1871, %v1978
          %v1989 = vsub.f32 %v1872, %v1978
          %v1990 = vsub.f32 %v1873, %v1978
          %v1991 = vsub.f32 %v1874, %v1978
          %v1992 = vsub.f32 %v1875, %v1978
          %v1993 = vsub.f32 %v1876, %v1978
          %v1994 = vsub.f32 %v1877, %v1978
          %v1995 = vmul.f32 %v1979, %v1908
          %v1996 = vmul.f32 %v1980, %v1909
          %v1997 = vmul.f32 %v1981, %v1910
          %v1998 = vmul.f32 %v1982, %v1911
          %v1999 = vmul.f32 %v1983, %v1912
          %v2000 = vmul.f32 %v1984, %v1913
          %v2001 = vmul.f32 %v1985, %v1914
          %v2002 = vmul.f32 %v1986, %v1915
          %v2003 = vmul.f32 %v1987, %v1916
          %v2004 = vmul.f32 %v1988, %v1917
          %v2005 = vmul.f32 %v1989, %v1918
          %v2006 = vmul.f32 %v1990, %v1919
          %v2007 = vmul.f32 %v1991, %v1920
          %v2008 = vmul.f32 %v1992, %v1921
          %v2009 = vmul.f32 %v1993, %v1922
          %v2010 = vmul.f32 %v1994, %v1923
          %v2011 = vmul.f32 %v1995, %v1995
          %v2012 = vmul.f32 %v1996, %v1996
          %v2013 = vmul.f32 %v1997, %v1997
          %v2014 = vmul.f32 %v1998, %v1998
          %v2015 = vmul.f32 %v1999, %v1999
          %v2016 = vmul.f32 %v2000, %v2000
          %v2017 = vmul.f32 %v2001, %v2001
          %v2018 = vmul.f32 %v2002, %v2002
          %v2019 = vmul.f32 %v2003, %v2003
          %v2020 = vmul.f32 %v2004, %v2004
          %v2021 = vmul.f32 %v2005, %v2005
          %v2022 = vmul.f32 %v2006, %v2006
          %v2023 = vmul.f32 %v2007, %v2007
          %v2024 = vmul.f32 %v2008, %v2008
          %v2025 = vmul.f32 %v2009, %v2009
          %v2026 = vmul.f32 %v2010, %v2010
          %v2027 = vsel %vm1940, %v2011, 0.0
          %v2028 = vsel %vm1940, %v2012, 0.0
          %v2029 = vadd.f32 %v2027, %v2028
          %v2030 = vsel %vm1940, %v2013, 0.0
          %v2031 = vadd.f32 %v2029, %v2030
          %v2032 = vsel %vm1940, %v2014, 0.0
          %v2033 = vadd.f32 %v2031, %v2032
          %v2034 = vsel %vm1940, %v2015, 0.0
          %v2035 = vadd.f32 %v2033, %v2034
          %v2036 = vsel %vm1940, %v2016, 0.0
          %v2037 = vadd.f32 %v2035, %v2036
          %v2038 = vsel %vm1940, %v2017, 0.0
          %v2039 = vadd.f32 %v2037, %v2038
          %v2040 = vsel %vm1940, %v2018, 0.0
          %v2041 = vadd.f32 %v2039, %v2040
          %v2042 = vsel %vm1940, %v2019, 0.0
          %v2043 = vadd.f32 %v2041, %v2042
          %v2044 = vsel %vm1940, %v2020, 0.0
          %v2045 = vadd.f32 %v2043, %v2044
          %v2046 = vsel %vm1940, %v2021, 0.0
          %v2047 = vadd.f32 %v2045, %v2046
          %v2048 = vsel %vm1940, %v2022, 0.0
          %v2049 = vadd.f32 %v2047, %v2048
          %v2050 = vsel %vm1940, %v2023, 0.0
          %v2051 = vadd.f32 %v2049, %v2050
          %v2052 = vsel %vm1940, %v2024, 0.0
          %v2053 = vadd.f32 %v2051, %v2052
          %v2054 = vsel %vm1940, %v2025, 0.0
          %v2055 = vadd.f32 %v2053, %v2054
          %v2056 = vsel %vm1940, %v2026, 0.0
          %v2057 = vadd.f32 %v2055, %v2056
          %v2058 = vrot.slane %v2057, 4
          %v2059 = vadd.f32 %v2057, %v2058
          %v2060 = vrot.slane %v2059, 2
          %v2061 = vadd.f32 %v2059, %v2060
          %v2062 = vrot.slane %v2061, 1
          %v2063 = vadd.f32 %v2061, %v2062
          %v2064 = vmul.f32 %v2063, 0.0625
          %v2065 = vld [vmem:[%s7] sm:$0x1]
          %v2066 = vld [vmem:[%s7 + $0x1] sm:$0x1]
          %v2067 = vperm.slane %v2065, 0
          %2084 = vrot.lane.b32.xlu0 %v1979, 32
          %v2085 = vpop.permute.xlu0 %2084
          %2086 = vrot.lane.b32.xlu0 %v1980, 32
          %v2087 = vpop.permute.xlu0 %2086
          %2088 = vrot.lane.b32.xlu0 %v1981, 32
          %v2089 = vpop.permute.xlu0 %2088
          %2090 = vrot.lane.b32.xlu0 %v1982, 32
          %v2091 = vpop.permute.xlu0 %2090
          %2092 = vrot.lane.b32.xlu0 %v1983, 32
          %v2093 = vpop.permute.xlu0 %2092
          %2094 = vrot.lane.b32.xlu0 %v1984, 32
          %v2095 = vpop.permute.xlu0 %2094
          %2096 = vrot.lane.b32.xlu0 %v1985, 32
          %v2097 = vpop.permute.xlu0 %2096
          %2098 = vrot.lane.b32.xlu0 %v1986, 32
          %v2099 = vpop.permute.xlu0 %2098
          %2100 = vrot.lane.b32.xlu0 %v1987, 32
          %v2101 = vpop.permute.xlu0 %2100
          %2102 = vrot.lane.b32.xlu0 %v1988, 32
          %v2103 = vpop.permute.xlu0 %2102
          %2104 = vrot.lane.b32.xlu0 %v1989, 32
          %v2105 = vpop.permute.xlu0 %2104
          %2106 = vrot.lane.b32.xlu0 %v1990, 32
          %v2107 = vpop.permute.xlu0 %2106
          %2108 = vrot.lane.b32.xlu0 %v1991, 32
          %v2109 = vpop.permute.xlu0 %2108
          %2110 = vrot.lane.b32.xlu0 %v1992, 32
          %v2111 = vpop.permute.xlu0 %2110
          %2112 = vrot.lane.b32.xlu0 %v1993, 32
          %v2113 = vpop.permute.xlu0 %2112
          %2114 = vrot.lane.b32.xlu0 %v1994, 32
          %v2115 = vpop.permute.xlu0 %2114
          %v2132 = vmul.f32 %v2067, %v2085
          %v2133 = vmul.f32 %v2067, %v2087
          %v2134 = vmul.f32 %v2067, %v2089
          %v2135 = vmul.f32 %v2067, %v2091
          %v2136 = vmul.f32 %v2067, %v2093
          %v2137 = vmul.f32 %v2067, %v2095
          %v2138 = vmul.f32 %v2067, %v2097
          %v2139 = vmul.f32 %v2067, %v2099
          %v2140 = vmul.f32 %v2067, %v2101
          %v2141 = vmul.f32 %v2067, %v2103
          %v2142 = vmul.f32 %v2067, %v2105
          %v2143 = vmul.f32 %v2067, %v2107
          %v2144 = vmul.f32 %v2067, %v2109
          %v2145 = vmul.f32 %v2067, %v2111
          %v2146 = vmul.f32 %v2067, %v2113
          %v2147 = vmul.f32 %v2067, %v2115
          %v2148 = vadd.f32 %v2064, 1e-05
          %v2149 = vrsqrt.pop %v2148
          %v2150 = vmul.f32 %v2149, %v2148
          %v2151 = vmul.f32 %v2150, %v2149
          %v2152 = vmul.f32 0.5, %v2151
          %v2153 = vsub.f32 1.5, %v2152
          %v2154 = vmul.f32 %v2149, %v2153
          %vm2155 = vweird.f32 %v2148
          %vm2156 = vweird.f32 %v2149
          %vm2157 = vmor %vm2155, %vm2156
          %v2158 = vsel %vm2157, %v2149, %v2154
          %2160 = vrot.lane.b32.xlu0 %v2158, 32
          %v2161 = vpop.permute.xlu0 %2160
          %v2163 = vmul.f32 %v2132, %v2161
          %v2164 = vmul.f32 %v2133, %v2161
          %v2165 = vmul.f32 %v2134, %v2161
          %v2166 = vmul.f32 %v2135, %v2161
          %v2167 = vmul.f32 %v2136, %v2161
          %v2168 = vmul.f32 %v2137, %v2161
          %v2169 = vmul.f32 %v2138, %v2161
          %v2170 = vmul.f32 %v2139, %v2161
          %v2171 = vmul.f32 %v2140, %v2161
          %v2172 = vmul.f32 %v2141, %v2161
          %v2173 = vmul.f32 %v2142, %v2161
          %v2174 = vmul.f32 %v2143, %v2161
          %v2175 = vmul.f32 %v2144, %v2161
          %v2176 = vmul.f32 %v2145, %v2161
          %v2177 = vmul.f32 %v2146, %v2161
          %v2178 = vmul.f32 %v2147, %v2161
          %v2179 = vperm.slane %v2066, 0
          %v2180 = vadd.f32 %v2163, %v2179
          %v2181 = vadd.f32 %v2164, %v2179
          %v2182 = vadd.f32 %v2165, %v2179
          %v2183 = vadd.f32 %v2166, %v2179
          %v2184 = vadd.f32 %v2167, %v2179
          %v2185 = vadd.f32 %v2168, %v2179
          %v2186 = vadd.f32 %v2169, %v2179
          %v2187 = vadd.f32 %v2170, %v2179
          %v2188 = vadd.f32 %v2171, %v2179
          %v2189 = vadd.f32 %v2172, %v2179
          %v2190 = vadd.f32 %v2173, %v2179
          %v2191 = vadd.f32 %v2174, %v2179
          %v2192 = vadd.f32 %v2175, %v2179
          %v2193 = vadd.f32 %v2176, %v2179
          %v2194 = vadd.f32 %v2177, %v2179
          %v2195 = vadd.f32 %v2178, %v2179
          %v2196 = vmax.f32 %v2180, 0.0
          %v2197 = vmax.f32 %v2181, 0.0
          %v2198 = vmax.f32 %v2182, 0.0
          %v2199 = vmax.f32 %v2183, 0.0
          %v2200 = vmax.f32 %v2184, 0.0
          %v2201 = vmax.f32 %v2185, 0.0
          %v2202 = vmax.f32 %v2186, 0.0
          %v2203 = vmax.f32 %v2187, 0.0
          %v2204 = vmax.f32 %v2188, 0.0
          %v2205 = vmax.f32 %v2189, 0.0
          %v2206 = vmax.f32 %v2190, 0.0
          %v2207 = vmax.f32 %v2191, 0.0
          %v2208 = vmax.f32 %v2192, 0.0
          %v2209 = vmax.f32 %v2193, 0.0
          %v2210 = vmax.f32 %v2194, 0.0
          %v2211 = vmax.f32 %v2195, 0.0
          %v2212 = vld [vmem:[%s1] sm:$0xff]
          %v2213 = vld [vmem:[%s1 + $0x8] sm:$0xff]
          %v2214 = vld [vmem:[%s1 + $0x10] sm:$0xff]
          %v2215 = vld [vmem:[%s1 + $0x18] sm:$0xff]
          %v2216 = vld [vmem:[%s1 + $0x20] sm:$0xff]
          %v2217 = vld [vmem:[%s1 + $0x28] sm:$0xff]
          %v2218 = vld [vmem:[%s1 + $0x30] sm:$0xff]
          %v2219 = vld [vmem:[%s1 + $0x38] sm:$0xff]
          %v2220 = vld [vmem:[%s1 + $0x40] sm:$0xff]
          %v2221 = vld [vmem:[%s1 + $0x48] sm:$0xff]
          %v2222 = vld [vmem:[%s1 + $0x50] sm:$0xff]
          %v2223 = vld [vmem:[%s1 + $0x58] sm:$0xff]
          %v2224 = vld [vmem:[%s1 + $0x60] sm:$0xff]
          %v2225 = vld [vmem:[%s1 + $0x68] sm:$0xff]
          %v2226 = vld [vmem:[%s1 + $0x70] sm:$0xff]
          %v2227 = vld [vmem:[%s1 + $0x78] sm:$0xff]
          %v2228 = vadd.f32 %v2196, %v2212
          %v2229 = vadd.f32 %v2197, %v2213
          %v2230 = vadd.f32 %v2198, %v2214
          %v2231 = vadd.f32 %v2199, %v2215
          %v2232 = vadd.f32 %v2200, %v2216
          %v2233 = vadd.f32 %v2201, %v2217
          %v2234 = vadd.f32 %v2202, %v2218
          %v2235 = vadd.f32 %v2203, %v2219
          %v2236 = vadd.f32 %v2204, %v2220
          %v2237 = vadd.f32 %v2205, %v2221
          %v2238 = vadd.f32 %v2206, %v2222
          %v2239 = vadd.f32 %v2207, %v2223
          %v2240 = vadd.f32 %v2208, %v2224
          %v2241 = vadd.f32 %v2209, %v2225
          %v2242 = vadd.f32 %v2210, %v2226
          %v2243 = vadd.f32 %v2211, %v2227
          %2244 = vst.msk [vmem:[%s9] sm:$0xff] %vm680, %v2228
          %2245 = vst.msk [vmem:[%s9 + $0x8] sm:$0xff] %vm680, %v2229
          %2246 = vst.msk [vmem:[%s9 + $0x10] sm:$0xff] %vm680, %v2230
          %2247 = vst.msk [vmem:[%s9 + $0x18] sm:$0xff] %vm680, %v2231
          %2248 = vst.msk [vmem:[%s9 + $0x20] sm:$0xff] %vm680, %v2232
          %2249 = vst.msk [vmem:[%s9 + $0x28] sm:$0xff] %vm680, %v2233
          %2250 = vst.msk [vmem:[%s9 + $0x30] sm:$0xff] %vm680, %v2234
          %2251 = vst.msk [vmem:[%s9 + $0x38] sm:$0xff] %vm680, %v2235
          %2252 = vst.msk [vmem:[%s9 + $0x40] sm:$0xff] %vm680, %v2236
          %2253 = vst.msk [vmem:[%s9 + $0x48] sm:$0xff] %vm680, %v2237
          %2254 = vst.msk [vmem:[%s9 + $0x50] sm:$0xff] %vm680, %v2238
          %2255 = vst.msk [vmem:[%s9 + $0x58] sm:$0xff] %vm680, %v2239
          %2256 = vst.msk [vmem:[%s9 + $0x60] sm:$0xff] %vm680, %v2240
          %2257 = vst.msk [vmem:[%s9 + $0x68] sm:$0xff] %vm680, %v2241
          %2258 = vst.msk [vmem:[%s9 + $0x70] sm:$0xff] %vm680, %v2242
          %2259 = vst.msk [vmem:[%s9 + $0x78] sm:$0xff] %vm680, %v2243
          %v2260 = vld [vmem:[#allocation5] sm:$0x1]
          %v2261 = vmul.f32 %v2260, 0.017857144
          %v2262 = vld [vmem:[#allocation6] sm:$0x1]
          %v2263 = vmul.f32 %v2262, 0.017857144
          %v2264 = vmul.f32 %v2261, %v2261
          %v2265 = vsub.f32 %v2263, %v2264
          %v2266 = vld [vmem:[#allocation4] sm:$0x1]
          %v2267 = vadd.f32 %v2266, %v2261
          %v2268 = vld [vmem:[%s8] sm:$0x1]
          %v2269 = vld [vmem:[%s8 + $0x1] sm:$0x1]
          %v2270 = vadd.f32 %v2265, 1e-05
          %v2271 = vrsqrt.pop %v2270
          %v2272 = vmul.f32 %v2271, %v2270
          %v2273 = vmul.f32 %v2272, %v2271
          %v2274 = vmul.f32 0.5, %v2273
          %v2275 = vsub.f32 1.5, %v2274
          %v2276 = vmul.f32 %v2271, %v2275
          %vm2277 = vweird.f32 %v2270
          %vm2278 = vweird.f32 %v2271
          %vm2279 = vmor %vm2277, %vm2278
          %v2280 = vsel %vm2279, %v2271, %v2276
          %v2281 = vmul.f32 %v2268, %v2280
          %2282 = vst.msk [vmem:[#allocation7] sm:$0x1] %vm1025, %v2281
          %v2283 = vmul.f32 %v2267, %v2281
          %v2284 = vsub.f32 %v2269, %v2283
          %2285 = vst.msk [vmem:[#allocation7 + $0x1] sm:$0x1] %vm1025, %v2284
        $region68: #{tpu_custom_call.1} parent=55 // pred_fallthru
          _
        %s2286 = smul.u32 4, %s24
        %p2287 = scmp.lt.s32.totalorder %s2286, 7
        %s2288 = scalar_select %p2287, %s2286, 7
        %s2289 = smul.addr %s2288, 8
        %s2290 = scalar_lea.vmem %s10, %s2289
        // Predicated region
        $region69: #{tpu_custom_call.1} parent=55 // pred_check
          %p2291 = pneg %p236
        $region70: #{tpu_custom_call.1} parent=55 // pred_check_branch
          %2293 = sbr.rel (%p2291) target = $region72
        $region71: #{tpu_custom_call.1} parent=55 // pred_region
          _
        $region72: #{tpu_custom_call.1} parent=55 // pred_fallthru
          _
        // Predicated region
        $region73: #{tpu_custom_call.1} parent=55 // pred_check
          %p2294 = pneg %p262
        $region74: #{tpu_custom_call.1} parent=55 // pred_check_branch
          %2296 = sbr.rel (%p2294) target = $region76
        $region75: #{tpu_custom_call.1} parent=55 // pred_region
          %s2297 = smul.u32 4, %s24
        $region76: #{tpu_custom_call.1} parent=55 // pred_fallthru
          _
        // Predicated region
        $region77: #{tpu_custom_call.1} parent=55 // pred_check
          %p2298 = pneg %p283
        $region78: #{tpu_custom_call.1} parent=55 // pred_check_branch
          %2300 = sbr.rel (%p2298) target = $region80
        $region79: #{tpu_custom_call.1} parent=55 // pred_region
          %2302 = vsyncadd [#allocation8], 0
          %s2304 = sshll.u32 [#allocation7], 4
          %s2305 = int_to_ptr.vmem [resolvable:$true] %s2304
          %s2306 = sshll.u32 %s11, 4
          %s2307 = int_to_ptr.hbm [resolvable:$true] %s2306
          %2309 = dma.vmem_to_hbm [thread:$0]  %s2305, 32, %s2307, [#allocation8]
        $region80: #{tpu_custom_call.1} parent=55 // pred_fallthru
          _
        // Predicated region
        $region81: #{tpu_custom_call.1} parent=55 // pred_check
          %p2310 = pneg %p236
        $region82: #{tpu_custom_call.1} parent=55 // pred_check_branch
          %2312 = sbr.rel (%p2310) target = $region84
        $region83: #{tpu_custom_call.1} parent=55 // pred_region
          _
        $region84: #{tpu_custom_call.1} parent=55 // pred_fallthru
          _
        // Predicated region
        $region85: #{tpu_custom_call.1} parent=55 // pred_check
          %p2313 = pneg %p283
        $region86: #{tpu_custom_call.1} parent=55 // pred_check_branch
          %2315 = sbr.rel (%p2313) target = $region88
        $region87: #{tpu_custom_call.1} parent=55 // pred_region
          %2317 = dma.done [#allocation8], 32
        $region88: #{tpu_custom_call.1} parent=55 // pred_fallthru
          _
      $region56: #{tpu_custom_call.1} parent=5 // pred_fallthru
        _
      %p2318 = scmp.le.s32.totalorder 2, %s19
      // Predicated region
      $region89: #{tpu_custom_call.1} parent=5 // pred_check
        %p2319 = pneg %p2318
      $region90: #{tpu_custom_call.1} parent=5 // pred_check_branch
        %2321 = sbr.rel (%p2319) target = $region92
      $region91: #{tpu_custom_call.1} parent=5 // pred_region
        %s2322 = ssub.s32 %s19, 2
        // Predicated region
        $region93: #{tpu_custom_call.1} parent=91 // pred_check
          %p2323 = pneg %p268
        $region94: #{tpu_custom_call.1} parent=91 // pred_check_branch
          %2325 = sbr.rel (%p2323) target = $region96
        $region95: #{tpu_custom_call.1} parent=91 // pred_region
          %s2326 = smul.u32 4, %s25
          %p2327 = scmp.lt.s32.totalorder %s2326, 7
          %s2328 = scalar_select %p2327, %s2326, 7
          %s2329 = smul.addr %s2328, 8
          %s2330 = scalar_lea.vmem %s10, %s2329
        $region96: #{tpu_custom_call.1} parent=91 // pred_fallthru
          _
      $region92: #{tpu_custom_call.1} parent=5 // pred_fallthru
        _
    $region6: #{tpu_custom_call.1} parent=1 // loop_footer
      %s23 = sadd.s32 1, %s19
    $region7: #{tpu_custom_call.1} parent=1 // loop_footer_branch
      %18 = sbr.rel target = $region3
    $region8: #{tpu_custom_call.1} parent=1 // loop_exit
      _
    %2331 = vsyncpa [#allocation8], 1
    %s2332 = scalar_lea.sflag [#allocation8], 1
    %2333 = vsyncpa %s2332, 1

</llo_original>
